<compile_context>
chip_gen: v7x
topology: tpu7x:2x2x1
jax: 0.10.0
libtpu: 0.0.40
codegen_flags: <defaults>
</compile_context>

<pallas_src>
import functools

import jax
import jax.numpy as jnp
from jax import lax
from jax.experimental import pallas as pl
from jax.experimental.pallas import tpu as pltpu

LOG2E = 1.44269504          # same constant as the Triton kernel
MASK_VALUE = -2.4e38        # finite "-inf" for padded kv columns (bf16-safe)
LANES = 128                 # TPU vreg lane width


def _round_up(x, m):
    return (x + m - 1) // m * m


def _cdiv(a, b):
    return (a + b - 1) // b


def _lane_tile(x, reps):
    """Replicate a lane-replicated (rows, 128) tile to (rows, 128*reps)."""
    if reps == 1:
        return x
    return jnp.concatenate([x] * reps, axis=-1)


def _device_kind():
    try:
        return jax.devices()[0].device_kind.lower()
    except Exception:
        return ""


def _flash_fwd_kernel(q_ref, k_ref, v_ref, o_ref,
                      q_sc, m_sc, acc_sc, aux_sc, *,
                      sm_scale, n_ctx, fold_l, kv_masked, p_dtype):
    """One (batch*head, q-block) tile; grid axis 2 loops over kv blocks.

    Scratch:
      q_sc  : (BM, D)    staged (sm_scale*log2e)-scaled Q, input dtype
      m_sc  : (BM, 128)  running row max, lane-replicated, f32
      acc_sc: (BM, 128)  fold_l: output acc in [:, :D] and l in lane D
              (BM, D)    otherwise: output acc only
      aux_sc: (BN, 128)  fold_l: staged V tile with a ones column at lane D
              (BM, 128)  otherwise: running l, lane-replicated, f32
    """
    kv = pl.program_id(2)
    block_n = k_ref.shape[1]
    d = q_ref.shape[2]
    compute_dtype = v_ref.dtype

    @pl.when(kv == 0)
    def _init():
        m_sc[...] = jnp.full_like(m_sc, -jnp.inf)
        acc_sc[...] = jnp.zeros_like(acc_sc)
        # Hoist scale + downcast of Q out of the kv loop (Q block is resident
        # across grid axis 2).  Matches Triton: q = (q * qk_scale).to(fp16).
        q_sc[...] = (q_ref[0].astype(jnp.float32) * (sm_scale * LOG2E)
                     ).astype(q_sc.dtype)
        if fold_l:
            # Once per q-block: lane D of the staged V tile is 1.0, so the
            # P@V matmul also accumulates the row-sum of P (l) into acc[:, D].
            lane = lax.broadcasted_iota(jnp.int32, aux_sc.shape, 1)
            aux_sc[...] = (lane == d).astype(aux_sc.dtype)

    # Scores in log2 space: qk = (q * sm_scale * log2e) @ k^T.  NT-form
    # dot_general (contract last dims) is handled natively by Mosaic; if a
    # bundle dump ever shows a per-step K transpose on the critical path,
    # pre-lay K out as [B, D, N_CTX] in the wrapper instead.
    qk = lax.dot_general(
        q_sc[...], k_ref[0],
        dimension_numbers=(((1,), (1,)), ((), ())),
        preferred_element_type=jnp.float32)                        # [BM, BN]

    if kv_masked:
        col = kv * block_n + lax.broadcasted_iota(jnp.int32, qk.shape, 1)
        qk = jnp.where(col < n_ctx, qk, MASK_VALUE)

    # Online-softmax state kept lane-replicated (128 wide) so scratch
    # loads/stores are full-lane VPU ops.
    m_prev = m_sc[...]                                             # [BM,128]
    m_cur = jnp.max(qk, axis=-1, keepdims=True)                    # [BM,1]
    m_next = jnp.maximum(m_prev, m_cur)                            # [BM,128]
    alpha = jnp.exp2(m_prev - m_next)                              # [BM,128]
    m_sc[...] = m_next

    # exp2 in p_dtype (bf16 on v6e/v7x EUP, f32 on v5e / f32 inputs); the
    # result feeds the MXU directly, f32 accumulation via preferred dtype.
    p = jnp.exp2((qk - _lane_tile(m_next, block_n // LANES)).astype(p_dtype))
    pv = p.astype(compute_dtype)

    if fold_l:
        aux_sc[:, :d] = v_ref[0]                                   # stage V
        acc_sc[...] = acc_sc[...] * alpha + jnp.dot(
            pv, aux_sc[...], preferred_element_type=jnp.float32)
    else:
        aux_sc[...] = aux_sc[...] * alpha + jnp.sum(
            p.astype(jnp.float32), axis=-1, keepdims=True)
        if d % LANES == 0:
            alpha_acc = _lane_tile(alpha, d // LANES)
        else:
            alpha_acc = alpha[:, :1]
        acc_sc[...] = acc_sc[...] * alpha_acc + jnp.dot(
            pv, v_ref[0], preferred_element_type=jnp.float32)

    @pl.when(kv == pl.num_programs(2) - 1)
    def _finalize():
        acc = acc_sc[...]
        if fold_l:
            l = acc[:, d:d + 1]
            out = acc[:, :d] * pl.reciprocal(l, approx=True)
        else:
            out = acc * pl.reciprocal(aux_sc[:, :1], approx=True)
        o_ref[0] = out.astype(o_ref.dtype)


def _pick_block(n_ctx, cap):
    """Largest 128-multiple tile <= cap dividing n_ctx; else a lane/sublane
    friendly tile (the wrapper pads + masks the remainder)."""
    for b in (1024, 512, 256, 128):
        if b <= cap and b <= n_ctx and n_ctx % b == 0:
            return b
    return min(cap, _round_up(n_ctx, LANES))


def flash_attn(q, k, v, sm_scale, block_128=True, block_m=None, block_n=None):
    """Matches triton_flash_attn.forward semantics.

    q, k, v: [Z, H, N_CTX, D]; returns o with the same shape/dtype as q.
    `block_128` is kept for API compatibility (Triton tuning knob); TPU tile
    sizes are chosen per-generation below unless overridden.  Inputs are
    expected in bf16 (TPU analogue of the Triton fp16 path); f32 inputs work
    but run the MXU in f32.
    """
    del block_128
    Z, H, N_CTX, D = q.shape
    assert k.shape == (Z, H, N_CTX, D) and v.shape == (Z, H, N_CTX, D)
    B = Z * H

    kind = _device_kind()
    older_gen = any(g in kind for g in ("v2", "v3", "v4", "v5"))

    # v5-gen: larger q tiles cut K/V HBM re-streaming (~ N_CTX^2*D/block_m).
    if block_m is None:
        block_m = _pick_block(N_CTX, 1024 if older_gen else 512)
    if block_n is None:
        block_n = _pick_block(N_CTX, 512)
    # v7x megacore: the two parallel grid axes must expose >= 2 work units.
    if "v7" in kind:
        while block_m >= 256 and B * _cdiv(N_CTX, block_m) < 2:
            block_m //= 2
    assert block_m % 8 == 0, "block_m must be a multiple of 8 sublanes"
    assert block_n % LANES == 0, "block_n must be a multiple of 128 lanes"

    # exp2 in bf16 on v6e/v7x (bf16 EUP); f32 on v5e-and-older / f32 inputs.
    p_dtype = (jnp.float32 if (older_gen or q.dtype == jnp.float32)
               else jnp.bfloat16)
    fold_l = D < LANES   # fold the row-sum of P into the P@V matmul

    qf = q.reshape(B, N_CTX, D)
    kf = k.reshape(B, N_CTX, D)
    vf = v.reshape(B, N_CTX, D)

    # Pad awkward sequence lengths up to the tile size instead of degrading
    # to tiny blocks; padded kv columns are masked inside the kernel, padded
    # q rows are sliced off below.
    n_q = _round_up(N_CTX, block_m)
    n_kv = _round_up(N_CTX, block_n)
    if n_q != N_CTX:
        qf = jnp.pad(qf, ((0, 0), (0, n_q - N_CTX), (0, 0)))
    if n_kv != N_CTX:
        kf = jnp.pad(kf, ((0, 0), (0, n_kv - N_CTX), (0, 0)))
        vf = jnp.pad(vf, ((0, 0), (0, n_kv - N_CTX), (0, 0)))
    kv_masked = n_kv != N_CTX

    in_bytes = q.dtype.itemsize
    scratch_shapes = [
        pltpu.VMEM((block_m, D), q.dtype),             # scaled Q
        pltpu.VMEM((block_m, LANES), jnp.float32),     # m_i (lane-replicated)
    ]
    if fold_l:
        scratch_shapes += [
            pltpu.VMEM((block_m, LANES), jnp.float32),  # acc (+ l at lane D)
            pltpu.VMEM((block_n, LANES), v.dtype),      # staged V + ones col
        ]
    else:
        scratch_shapes += [
            pltpu.VMEM((block_m, D), jnp.float32),      # acc
            pltpu.VMEM((block_m, LANES), jnp.float32),  # l_i (lane-replicated)
        ]

    # VMEM budget: double-buffered q/k/v/o tiles + scratch + qk/p temporaries.
    est = (2 * (2 * block_m * D + 2 * block_n * D) * in_bytes
           + block_m * D * in_bytes
           + 3 * block_m * LANES * 4
           + block_n * LANES * in_bytes
           + 3 * block_m * block_n * 4)
    hard_cap = (56 if "v7" in kind else 96) * 1024 * 1024
    vmem_limit = int(min(max(2 * est, 32 * 1024 * 1024), hard_cap))

    kernel = functools.partial(
        _flash_fwd_kernel, sm_scale=float(sm_scale), n_ctx=N_CTX,
        fold_l=fold_l, kv_masked=kv_masked, p_dtype=p_dtype)

    out = pl.pallas_call(
        kernel,
        out_shape=jax.ShapeDtypeStruct((B, n_q, D), q.dtype),
        grid_spec=pltpu.PrefetchScalarGridSpec(
            num_scalar_prefetch=0,
            grid=(B, n_q // block_m, n_kv // block_n),
            in_specs=[
                pl.BlockSpec((1, block_m, D), lambda b, i, j: (b, i, 0)),  # Q
                pl.BlockSpec((1, block_n, D), lambda b, i, j: (b, j, 0)),  # K
                pl.BlockSpec((1, block_n, D), lambda b, i, j: (b, j, 0)),  # V
            ],
            out_specs=pl.BlockSpec((1, block_m, D), lambda b, i, j: (b, i, 0)),
            scratch_shapes=scratch_shapes,
        ),
        compiler_params=pltpu.CompilerParams(
            dimension_semantics=("parallel", "parallel", "arbitrary"),
            vmem_limit_bytes=vmem_limit),
    )(qf, kf, vf)

    if n_q != N_CTX:
        out = out[:, :N_CTX]
    return out.reshape(Z, H, N_CTX, D)


def _reference(q, k, v, sm_scale):
    qf = q.astype(jnp.float32)
    kf = k.astype(jnp.float32)
    vf = v.astype(jnp.float32)
    s = jnp.einsum("zhqd,zhkd->zhqk", qf, kf) * sm_scale
    p = jax.nn.softmax(s, axis=-1)
    return jnp.einsum("zhqk,zhkd->zhqd", p, vf).astype(q.dtype)


def _max_err(a, b):
    return float(jnp.max(jnp.abs(a.astype(jnp.float32) - b.astype(jnp.float32))))


if __name__ == "__main__":
    key = jax.random.PRNGKey(0)
    Z, H, N_CTX, D = 2, 2, 256, 64
    kq, kk, kv_ = jax.random.split(key, 3)
    q = jax.random.normal(kq, (Z, H, N_CTX, D), dtype=jnp.float32).astype(jnp.bfloat16)
    k = jax.random.normal(kk, (Z, H, N_CTX, D), dtype=jnp.float32).astype(jnp.bfloat16)
    v = jax.random.normal(kv_, (Z, H, N_CTX, D), dtype=jnp.float32).astype(jnp.bfloat16)
    sm_scale = 1.0 / (D ** 0.5)
    # bf16 inputs + bf16 softmax weights (v6e/v7x path) + approx reciprocal.
    tol = 6e-2

    ref = _reference(q, k, v, sm_scale)

    # Default (auto) tiles: single kv step per q-block at this N_CTX.
    o1 = jax.block_until_ready(flash_attn(q, k, v, sm_scale))
    assert o1.shape == q.shape and o1.dtype == q.dtype
    e1 = _max_err(o1, ref)
    assert e1 < tol, f"max abs err too large (auto tiles): {e1}"

    # Explicit 128x128 tiles so the online-softmax kv loop runs twice.
    o2 = jax.block_until_ready(
        flash_attn(q, k, v, sm_scale, block_m=128, block_n=128))
    e2 = _max_err(o2, ref)
    assert e2 < tol, f"max abs err too large (128x128 tiles): {e2}"

    # Awkward sequence length: exercises the pad + kv-mask path.
    n_odd = 200
    q3, k3, v3 = q[:, :, :n_odd], k[:, :, :n_odd], v[:, :, :n_odd]
    ref3 = _reference(q3, k3, v3, sm_scale)
    o3 = jax.block_until_ready(
        flash_attn(q3, k3, v3, sm_scale, block_m=128, block_n=128))
    e3 = _max_err(o3, ref3)
    assert e3 < tol, f"max abs err too large (padded/masked): {e3}"

    print("KERNEL_OK")
</pallas_src>

<mosaic_0001>
module attributes {stable_mosaic.version = 11 : i64} {
  func.func @_flash_fwd_kernel(%arg0: i32, %arg1: i32, %arg2: i32, %arg3: memref<1x256x64xbf16, #tpu.memory_space<vmem>>, %arg4: memref<1x256x64xbf16, #tpu.memory_space<vmem>>, %arg5: memref<1x256x64xbf16, #tpu.memory_space<vmem>>, %arg6: memref<1x256x64xbf16, #tpu.memory_space<vmem>>, %arg7: memref<256x64xbf16, #tpu.memory_space<vmem>>, %arg8: memref<256x128xf32, #tpu.memory_space<vmem>>, %arg9: memref<256x128xf32, #tpu.memory_space<vmem>>, %arg10: memref<256x128xbf16, #tpu.memory_space<vmem>>) attributes {dimension_semantics = [#tpu.dimension_semantics<parallel>, #tpu.dimension_semantics<parallel>, #tpu.dimension_semantics<arbitrary>], iteration_bounds = array<i64: 4, 1, 1>, scalar_prefetch = 0 : i64, scratch_operands = 4 : i64, tpu.core_type = #tpu.core_type<tc>, window_params = [{transform_indices = @transform_0, window_bounds = array<i64: 1, 256, 64>}, {transform_indices = @transform_1, window_bounds = array<i64: 1, 256, 64>}, {transform_indices = @transform_2, window_bounds = array<i64: 1, 256, 64>}, {transform_indices = @transform_3, window_bounds = array<i64: 1, 256, 64>}]} {
    %c0_i32 = arith.constant 0 : i32
    %0 = arith.cmpi eq, %arg2, %c0_i32 : i32
    %1 = arith.extui %0 : i1 to i32
    %c0_i32_0 = arith.constant 0 : i32
    %2 = arith.cmpi ne, %1, %c0_i32_0 : i32
    scf.if %2 {
      %cst_24 = arith.constant 0xFF800000 : f32
      %31 = vector.broadcast %cst_24 : f32 to vector<256x128xf32>
      %c0_25 = arith.constant 0 : index
      %c0_26 = arith.constant 0 : index
      %32 = vector.load %arg8[%c0_25, %c0_26] : memref<256x128xf32, #tpu.memory_space<vmem>>, vector<256x128xf32>
      tpu.vector_store %arg8[%c0_25, %c0_26], %31 {strides = array<i32>} : memref<256x128xf32, #tpu.memory_space<vmem>>, vector<256x128xf32>,
      %cst_27 = arith.constant 0.000000e+00 : f32
      %33 = vector.broadcast %cst_27 : f32 to vector<256x128xf32>
      %c0_28 = arith.constant 0 : index
      %c0_29 = arith.constant 0 : index
      %34 = vector.load %arg9[%c0_28, %c0_29] : memref<256x128xf32, #tpu.memory_space<vmem>>, vector<256x128xf32>
      tpu.vector_store %arg9[%c0_28, %c0_29], %33 {strides = array<i32>} : memref<256x128xf32, #tpu.memory_space<vmem>>, vector<256x128xf32>,
      %c0_30 = arith.constant 0 : index
      %c0_31 = arith.constant 0 : index
      %c0_32 = arith.constant 0 : index
      %35 = vector.load %arg3[%c0_30, %c0_31, %c0_32] : memref<1x256x64xbf16, #tpu.memory_space<vmem>>, vector<1x256x64xbf16>
      %36 = vector.shape_cast %35 : vector<1x256x64xbf16> to vector<256x64xbf16>
      %37 = arith.extf %36 : vector<256x64xbf16> to vector<256x64xf32>
      %cst_33 = arith.constant 0.180336878 : f32
      %38 = vector.broadcast %cst_33 : f32 to vector<256x64xf32>
      %39 = arith.mulf %37, %38 : vector<256x64xf32>
      %40 = arith.truncf %39 : vector<256x64xf32> to vector<256x64xbf16>
      %c0_34 = arith.constant 0 : index
      %c0_35 = arith.constant 0 : index
      %41 = vector.load %arg7[%c0_34, %c0_35] : memref<256x64xbf16, #tpu.memory_space<vmem>>, vector<256x64xbf16>
      tpu.vector_store %arg7[%c0_34, %c0_35], %40 {strides = array<i32>} : memref<256x64xbf16, #tpu.memory_space<vmem>>, vector<256x64xbf16>,
      %42 = tpu.iota {dimensions = array<i32: 1>} : vector<256x128xi32>
      %c64_i32 = arith.constant 64 : i32
      %43 = vector.broadcast %c64_i32 : i32 to vector<256x128xi32>
      %44 = arith.cmpi eq, %42, %43 : vector<256x128xi32>
      %45 = arith.extui %44 : vector<256x128xi1> to vector<256x128xi32>
      %46 = arith.sitofp %45 : vector<256x128xi32> to vector<256x128xf32>
      %47 = arith.truncf %46 : vector<256x128xf32> to vector<256x128xbf16>
      %c0_36 = arith.constant 0 : index
      %c0_37 = arith.constant 0 : index
      %48 = vector.load %arg10[%c0_36, %c0_37] : memref<256x128xbf16, #tpu.memory_space<vmem>>, vector<256x128xbf16>
      tpu.vector_store %arg10[%c0_36, %c0_37], %47 {strides = array<i32>} : memref<256x128xbf16, #tpu.memory_space<vmem>>, vector<256x128xbf16>,
    } else {
    }
    %c0 = arith.constant 0 : index
    %c0_1 = arith.constant 0 : index
    %3 = vector.load %arg7[%c0, %c0_1] : memref<256x64xbf16, #tpu.memory_space<vmem>>, vector<256x64xbf16>
    %c0_2 = arith.constant 0 : index
    %c0_3 = arith.constant 0 : index
    %c0_4 = arith.constant 0 : index
    %4 = vector.load %arg4[%c0_2, %c0_3, %c0_4] : memref<1x256x64xbf16, #tpu.memory_space<vmem>>, vector<1x256x64xbf16>
    %5 = vector.shape_cast %4 : vector<1x256x64xbf16> to vector<256x64xbf16>
    %cst = arith.constant dense<0.000000e+00> : vector<256x256xf32>
    %6 = tpu.matmul %3, %5, %cst {dimension_numbers = #tpu.dot_dimension_numbers<[1], [1], [0], [0], [0, 0, 1, 0], [], []>} : vector<256x64xbf16>, vector<256x64xbf16>, vector<256x256xf32> -> vector<256x256xf32>
    %c0_5 = arith.constant 0 : index
    %c0_6 = arith.constant 0 : index
    %7 = vector.load %arg8[%c0_5, %c0_6] : memref<256x128xf32, #tpu.memory_space<vmem>>, vector<256x128xf32>
    %cst_7 = arith.constant dense<0xFF800000> : vector<256xf32>
    %8 = vector.multi_reduction <maximumf>, %6, %cst_7 [1] : vector<256x256xf32> to vector<256xf32>
    %9 = vector.shape_cast %8 : vector<256xf32> to vector<256x1xf32>
    %10 = vector.broadcast %9 : vector<256x1xf32> to vector<256x128xf32>
    %11 = arith.maximumf %7, %10 : vector<256x128xf32>
    %12 = arith.subf %7, %11 : vector<256x128xf32>
    %13 = math.exp2 %12 : vector<256x128xf32>
    %c0_8 = arith.constant 0 : index
    %c0_9 = arith.constant 0 : index
    %14 = vector.load %arg8[%c0_8, %c0_9] : memref<256x128xf32, #tpu.memory_space<vmem>>, vector<256x128xf32>
    tpu.vector_store %arg8[%c0_8, %c0_9], %11 {strides = array<i32>} : memref<256x128xf32, #tpu.memory_space<vmem>>, vector<256x128xf32>,
    %15 = tpu.concatenate %11, %11 in 1 : vector<256x128xf32>, vector<256x128xf32> -> vector<256x256xf32>
    %16 = arith.subf %6, %15 : vector<256x256xf32>
    %17 = arith.truncf %16 : vector<256x256xf32> to vector<256x256xbf16>
    %18 = math.exp2 %17 : vector<256x256xbf16>
    %c0_10 = arith.constant 0 : index
    %c0_11 = arith.constant 0 : index
    %c0_12 = arith.constant 0 : index
    %19 = vector.load %arg5[%c0_10, %c0_11, %c0_12] : memref<1x256x64xbf16, #tpu.memory_space<vmem>>, vector<1x256x64xbf16>
    %20 = vector.shape_cast %19 : vector<1x256x64xbf16> to vector<256x64xbf16>
    %c0_13 = arith.constant 0 : index
    %c0_14 = arith.constant 0 : index
    %21 = vector.load %arg10[%c0_13, %c0_14] : memref<256x128xbf16, #tpu.memory_space<vmem>>, vector<256x64xbf16>
    tpu.vector_store %arg10[%c0_13, %c0_14], %20 {strides = array<i32>} : memref<256x128xbf16, #tpu.memory_space<vmem>>, vector<256x64xbf16>,
    %c0_15 = arith.constant 0 : index
    %c0_16 = arith.constant 0 : index
    %22 = vector.load %arg9[%c0_15, %c0_16] : memref<256x128xf32, #tpu.memory_space<vmem>>, vector<256x128xf32>
    %23 = arith.mulf %22, %13 : vector<256x128xf32>
    %c0_17 = arith.constant 0 : index
    %c0_18 = arith.constant 0 : index
    %24 = vector.load %arg10[%c0_17, %c0_18] : memref<256x128xbf16, #tpu.memory_space<vmem>>, vector<256x128xbf16>
    %cst_19 = arith.constant dense<0.000000e+00> : vector<256x128xf32>
    %25 = tpu.matmul %18, %24, %cst_19 {dimension_numbers = #tpu.dot_dimension_numbers<[1], [0], [0], [1], [0, 0, 1, 1], [], []>} : vector<256x256xbf16>, vector<256x128xbf16>, vector<256x128xf32> -> vector<256x128xf32>
    %26 = arith.addf %23, %25 : vector<256x128xf32>
    %c0_20 = arith.constant 0 : index
    %c0_21 = arith.constant 0 : index
    %27 = vector.load %arg9[%c0_20, %c0_21] : memref<256x128xf32, #tpu.memory_space<vmem>>, vector<256x128xf32>
    tpu.vector_store %arg9[%c0_20, %c0_21], %26 {strides = array<i32>} : memref<256x128xf32, #tpu.memory_space<vmem>>, vector<256x128xf32>,
    %c0_i32_22 = arith.constant 0 : i32
    %28 = arith.cmpi eq, %arg2, %c0_i32_22 : i32
    %29 = arith.extui %28 : i1 to i32
    %c0_i32_23 = arith.constant 0 : i32
    %30 = arith.cmpi ne, %29, %c0_i32_23 : i32
    scf.if %30 {
      %c0_24 = arith.constant 0 : index
      %c0_25 = arith.constant 0 : index
      %31 = vector.load %arg9[%c0_24, %c0_25] : memref<256x128xf32, #tpu.memory_space<vmem>>, vector<256x128xf32>
      %32 = vector.extract_strided_slice %31 {offsets = [0, 64], sizes = [256, 1], strides = [1, 1]} : vector<256x128xf32> to vector<256x1xf32>
      %33 = vector.extract_strided_slice %31 {offsets = [0, 0], sizes = [256, 64], strides = [1, 1]} : vector<256x128xf32> to vector<256x64xf32>
      %34 = tpu.reciprocal %32 {approx = true} : vector<256x1xf32> -> vector<256x1xf32>
      %35 = vector.broadcast %34 : vector<256x1xf32> to vector<256x64xf32>
      %36 = arith.mulf %33, %35 : vector<256x64xf32>
      %37 = arith.truncf %36 : vector<256x64xf32> to vector<256x64xbf16>
      %c0_26 = arith.constant 0 : index
      %c0_27 = arith.constant 0 : index
      %c0_28 = arith.constant 0 : index
      %38 = vector.load %arg6[%c0_26, %c0_27, %c0_28] : memref<1x256x64xbf16, #tpu.memory_space<vmem>>, vector<1x256x64xbf16>
      %39 = vector.shape_cast %38 : vector<1x256x64xbf16> to vector<256x64xbf16>
      %40 = vector.shape_cast %37 : vector<256x64xbf16> to vector<1x256x64xbf16>
      tpu.vector_store %arg6[%c0_26, %c0_27, %c0_28], %40 {strides = array<i32>} : memref<1x256x64xbf16, #tpu.memory_space<vmem>>, vector<1x256x64xbf16>,
    } else {
    }
    return
  }
  func.func @transform_0(%arg0: i32, %arg1: i32, %arg2: i32) -> (i32, i32, i32) {
    %c0_i32 = arith.constant 0 : i32
    %c0_i32_0 = arith.constant 0 : i32
    return %arg0, %arg1, %c0_i32 : i32, i32, i32
  }
  func.func @transform_1(%arg0: i32, %arg1: i32, %arg2: i32) -> (i32, i32, i32) {
    %c0_i32 = arith.constant 0 : i32
    %c0_i32_0 = arith.constant 0 : i32
    return %arg0, %arg2, %c0_i32 : i32, i32, i32
  }
  func.func @transform_2(%arg0: i32, %arg1: i32, %arg2: i32) -> (i32, i32, i32) {
    %c0_i32 = arith.constant 0 : i32
    %c0_i32_0 = arith.constant 0 : i32
    return %arg0, %arg2, %c0_i32 : i32, i32, i32
  }
  func.func @transform_3(%arg0: i32, %arg1: i32, %arg2: i32) -> (i32, i32, i32) {
    %c0_i32 = arith.constant 0 : i32
    %c0_i32_0 = arith.constant 0 : i32
    return %arg0, %arg1, %c0_i32 : i32, i32, i32
  }
}

</mosaic_0001>

<llo_original>
// kernel: tpu_custom_call.1
$region0: #{tpu_custom_call.1}
  #allocation0 [shape = 'u32[]', space=smem, size = 0x4, offset = 0x4, fixed_abs, tag = 'smem constant byte address 0x4 - core index']
  #allocation1 [shape = 'u32[144,128]{1,0:T(1,128)}', space=vmem, size = 0x12000, scoped, tag = 'internal scratch']
  #allocation2 [shape = 'bf16[256,64]{1,0:T(16,128)(2,1)}', space=vmem, size = 0x10000, scoped, tag = 'scratch operand']
  #allocation3 [shape = 'f32[256,128]{1,0:T(8,128)}', space=vmem, size = 0x20000, scoped, tag = 'scratch operand']
  #allocation4 [shape = 'f32[256,128]{1,0:T(8,128)}', space=vmem, size = 0x20000, scoped, tag = 'scratch operand']
  #allocation5 [shape = 'bf16[256,128]{1,0:T(16,128)(2,1)}', space=vmem, size = 0x10000, scoped, tag = 'scratch operand']
  %s0 = inlined_call_operand.vmem [shape: bf16[4,256,64], index: 0, kind: input, shape index: {}]
  %s1 = inlined_call_operand.vmem [shape: bf16[4,256,64], index: 1, kind: input, shape index: {}]
  %s2 = inlined_call_operand.vmem [shape: bf16[4,256,64], index: 2, kind: input, shape index: {}]
  %s3 = inlined_call_operand.vmem [shape: bf16[4,256,64], index: 3, kind: output, shape index: {}]
  %s4 = sld [smem:[#allocation0]]
  $region53: #{tpu_custom_call.1} parent=0
    _
  %s6 = ssub.s32 1, %s4
  %s7 = scalar_select 0, %s6, %s4
  loop: start=0, step=1, limit=6
  $region2: #{tpu_custom_call.1} parent=0 // loop_pre_header
    _
  $region3: #{tpu_custom_call.1} parent=0 // loop_header
    %s9 = sphi 0, %s13
    %p10 = scmp.ge.s32.totalorder %s9, 6
    %s16 = sphi 0, %s35
    %s17 = sphi 0, %s31
    %s18 = sphi 0, %s27
    %s19 = sphi 0, %s16
    %s20 = sphi 0, %s17
    %s21 = sphi 0, %s18
    %s22 = sphi 0, %s19
    %s23 = sphi 0, %s20
    %s24 = sphi 0, %s21
    %s40 = sphi 0, %s42
    %s43 = sphi 0, %s40
    %s44 = sphi 0, %s43
    %s60 = sphi 0, %s44
    %s68 = sphi 0, %s70
    %s71 = sphi 0, %s68
    %s72 = sphi 0, %s71
    %s88 = sphi 0, %s72
    %s96 = sphi 0, %s98
    %s99 = sphi 0, %s96
    %s100 = sphi 0, %s99
    %s116 = sphi 0, %s100
    %s124 = sphi 0, %s126
    %s127 = sphi 0, %s124
    %s128 = sphi 0, %s127
    %s144 = sphi 0, %s128
  $region4: #{tpu_custom_call.1} parent=0 // loop_header_branch
    %12 = sbr.rel (%p10) target = $region8
  $region5: #{tpu_custom_call.1} parent=0 // loop_body
    %s14 = ssub.s32 %s9, 1
    %s15 = ssub.s32 %s9, 2
    %s25 = sadd.s32 1, %s18
    %p26 = scmp.ge.s32.totalorder %s25, 1
    %s27 = scalar_select %p26, 0, %s25
    %s28 = sadd.s32 1, %s17
    %s29 = scalar_select %p26, %s28, %s17
    %p30 = scmp.ge.s32.totalorder %s29, 1
    %s31 = scalar_select %p30, 0, %s29
    %s32 = sadd.s32 1, %s16
    %s33 = scalar_select %p30, %s32, %s16
    %p34 = scmp.ge.s32.totalorder %s33, 4
    %s35 = scalar_select %p34, 0, %s33
    %s36 = ssub.s32 %s16, %s35
    %s37 = ssub.s32 %s17, %s31
    %s38 = sor.u32 %s36, %s37
    %p39 = scmp.eq.s32.totalorder %s38, 0
    %s41 = sadd.s32 %s40, 1
    %s42 = scalar_select %p39, %s40, %s41
    %p45 = pneg %p39
    %p46 = scmp.eq.s32.totalorder %s9, 3
    %p47 = por %p45, %p46
    %p48 = scmp.ne.s32.totalorder %s40, %s43
    %p49 = scmp.eq.s32.totalorder %s9, 0
    %p50 = por %p48, %p49
    %p51 = scmp.ne.s32.totalorder %s40, %s43
    %p52 = scmp.eq.s32.totalorder %s14, 3
    %p53 = por %p51, %p52
    %p54 = scmp.ne.s32.totalorder %s43, %s44
    %p55 = scmp.eq.s32.totalorder %s14, 0
    %p56 = por %p54, %p55
    %p57 = scmp.ne.s32.totalorder %s43, %s44
    %p58 = scmp.eq.s32.totalorder %s15, 3
    %p59 = por %p57, %p58
    %p61 = scmp.ne.s32.totalorder %s44, %s60
    %p62 = scmp.eq.s32.totalorder %s15, 0
    %p63 = por %p61, %p62
    %s64 = ssub.s32 %s16, %s35
    %s65 = ssub.s32 %s18, %s27
    %s66 = sor.u32 %s64, %s65
    %p67 = scmp.eq.s32.totalorder %s66, 0
    %s69 = sadd.s32 %s68, 1
    %s70 = scalar_select %p67, %s68, %s69
    %p73 = pneg %p67
    %p74 = scmp.eq.s32.totalorder %s9, 3
    %p75 = por %p73, %p74
    %p76 = scmp.ne.s32.totalorder %s68, %s71
    %p77 = scmp.eq.s32.totalorder %s9, 0
    %p78 = por %p76, %p77
    %p79 = scmp.ne.s32.totalorder %s68, %s71
    %p80 = scmp.eq.s32.totalorder %s14, 3
    %p81 = por %p79, %p80
    %p82 = scmp.ne.s32.totalorder %s71, %s72
    %p83 = scmp.eq.s32.totalorder %s14, 0
    %p84 = por %p82, %p83
    %p85 = scmp.ne.s32.totalorder %s71, %s72
    %p86 = scmp.eq.s32.totalorder %s15, 3
    %p87 = por %p85, %p86
    %p89 = scmp.ne.s32.totalorder %s72, %s88
    %p90 = scmp.eq.s32.totalorder %s15, 0
    %p91 = por %p89, %p90
    %s92 = ssub.s32 %s16, %s35
    %s93 = ssub.s32 %s18, %s27
    %s94 = sor.u32 %s92, %s93
    %p95 = scmp.eq.s32.totalorder %s94, 0
    %s97 = sadd.s32 %s96, 1
    %s98 = scalar_select %p95, %s96, %s97
    %p101 = pneg %p95
    %p102 = scmp.eq.s32.totalorder %s9, 3
    %p103 = por %p101, %p102
    %p104 = scmp.ne.s32.totalorder %s96, %s99
    %p105 = scmp.eq.s32.totalorder %s9, 0
    %p106 = por %p104, %p105
    %p107 = scmp.ne.s32.totalorder %s96, %s99
    %p108 = scmp.eq.s32.totalorder %s14, 3
    %p109 = por %p107, %p108
    %p110 = scmp.ne.s32.totalorder %s99, %s100
    %p111 = scmp.eq.s32.totalorder %s14, 0
    %p112 = por %p110, %p111
    %p113 = scmp.ne.s32.totalorder %s99, %s100
    %p114 = scmp.eq.s32.totalorder %s15, 3
    %p115 = por %p113, %p114
    %p117 = scmp.ne.s32.totalorder %s100, %s116
    %p118 = scmp.eq.s32.totalorder %s15, 0
    %p119 = por %p117, %p118
    %s120 = ssub.s32 %s16, %s35
    %s121 = ssub.s32 %s17, %s31
    %s122 = sor.u32 %s120, %s121
    %p123 = scmp.eq.s32.totalorder %s122, 0
    %s125 = sadd.s32 %s124, 1
    %s126 = scalar_select %p123, %s124, %s125
    %p129 = pneg %p123
    %p130 = scmp.eq.s32.totalorder %s9, 3
    %p131 = por %p129, %p130
    %p132 = scmp.ne.s32.totalorder %s124, %s127
    %p133 = scmp.eq.s32.totalorder %s9, 0
    %p134 = por %p132, %p133
    %p135 = scmp.ne.s32.totalorder %s124, %s127
    %p136 = scmp.eq.s32.totalorder %s14, 3
    %p137 = por %p135, %p136
    %p138 = scmp.ne.s32.totalorder %s127, %s128
    %p139 = scmp.eq.s32.totalorder %s14, 0
    %p140 = por %p138, %p139
    %p141 = scmp.ne.s32.totalorder %s127, %s128
    %p142 = scmp.eq.s32.totalorder %s15, 3
    %p143 = por %p141, %p142
    %p145 = scmp.ne.s32.totalorder %s128, %s144
    %p146 = scmp.eq.s32.totalorder %s15, 0
    %p147 = por %p145, %p146
    %p148 = scmp.le.s32.totalorder 1, %s9
    %p149 = scmp.lt.s32.totalorder %s9, 5
    %p150 = pnand %p148, %p149
    %p151 = pneg %p150
    // Predicated region
    $region9: #{tpu_custom_call.1} parent=5 // pred_check
      _
    $region10: #{tpu_custom_call.1} parent=5 // pred_check_branch
      %153 = sbr.rel (%p150) target = $region12
    $region11: #{tpu_custom_call.1} parent=5 // pred_region
      %s154 = ssub.s32 %s9, 1
    $region12: #{tpu_custom_call.1} parent=5 // pred_fallthru
      _
    %p155 = scmp.lt.s32.totalorder %s9, 4
    // Predicated region
    $region13: #{tpu_custom_call.1} parent=5 // pred_check
      %p156 = pneg %p155
    $region14: #{tpu_custom_call.1} parent=5 // pred_check_branch
      %158 = sbr.rel (%p156) target = $region16
    $region15: #{tpu_custom_call.1} parent=5 // pred_region
      // Predicated region
      $region17: #{tpu_custom_call.1} parent=15 // pred_check
        %p159 = pneg %p50
      $region18: #{tpu_custom_call.1} parent=15 // pred_check_branch
        %161 = sbr.rel (%p159) target = $region20
      $region19: #{tpu_custom_call.1} parent=15 // pred_region
        %s162 = smul.u32 32, %s17
        %p163 = scmp.lt.s32.totalorder %s16, 3
        %s164 = scalar_select %p163, %s16, 3
        %p165 = scmp.lt.s32.totalorder %s162, 31
        %s166 = scalar_select %p165, %s162, 31
        %s167 = smul.addr %s164, 32
        %s168 = sadd.s32 %s166, %s167
        %s169 = smul.addr %s168, 4
        %s170 = scalar_lea.vmem %s0, %s169
        %s171 = smul.u32 32, %s17
      $region20: #{tpu_custom_call.1} parent=15 // pred_fallthru
        _
      // Predicated region
      $region21: #{tpu_custom_call.1} parent=15 // pred_check
        %p172 = pneg %p78
      $region22: #{tpu_custom_call.1} parent=15 // pred_check_branch
        %174 = sbr.rel (%p172) target = $region24
      $region23: #{tpu_custom_call.1} parent=15 // pred_region
        %s175 = smul.u32 32, %s18
        %p176 = scmp.lt.s32.totalorder %s16, 3
        %s177 = scalar_select %p176, %s16, 3
        %p178 = scmp.lt.s32.totalorder %s175, 31
        %s179 = scalar_select %p178, %s175, 31
        %s180 = smul.addr %s177, 32
        %s181 = sadd.s32 %s179, %s180
        %s182 = smul.addr %s181, 4
        %s183 = scalar_lea.vmem %s1, %s182
        %s184 = smul.u32 32, %s18
      $region24: #{tpu_custom_call.1} parent=15 // pred_fallthru
        _
      // Predicated region
      $region25: #{tpu_custom_call.1} parent=15 // pred_check
        %p185 = pneg %p106
      $region26: #{tpu_custom_call.1} parent=15 // pred_check_branch
        %187 = sbr.rel (%p185) target = $region28
      $region27: #{tpu_custom_call.1} parent=15 // pred_region
        %s188 = smul.u32 32, %s18
        %p189 = scmp.lt.s32.totalorder %s16, 3
        %s190 = scalar_select %p189, %s16, 3
        %p191 = scmp.lt.s32.totalorder %s188, 31
        %s192 = scalar_select %p191, %s188, 31
        %s193 = smul.addr %s190, 32
        %s194 = sadd.s32 %s192, %s193
        %s195 = smul.addr %s194, 4
        %s196 = scalar_lea.vmem %s2, %s195
        %s197 = smul.u32 32, %s18
      $region28: #{tpu_custom_call.1} parent=15 // pred_fallthru
        _
    $region16: #{tpu_custom_call.1} parent=5 // pred_fallthru
      _
    %p198 = scmp.le.s32.totalorder 1, %s9
    %p199 = scmp.lt.s32.totalorder %s9, 5
    %p200 = pnand %p198, %p199
    %p201 = pneg %p200
    // Predicated region
    $region29: #{tpu_custom_call.1} parent=5 // pred_check
      _
    $region30: #{tpu_custom_call.1} parent=5 // pred_check_branch
      %203 = sbr.rel (%p200) target = $region32
    $region31: #{tpu_custom_call.1} parent=5 // pred_region
      %s204 = ssub.s32 %s9, 1
      %s205 = smul.u32 32, %s20
      %p206 = scmp.lt.s32.totalorder %s19, 3
      %s207 = scalar_select %p206, %s19, 3
      %p208 = scmp.lt.s32.totalorder %s205, 31
      %s209 = scalar_select %p208, %s205, 31
      %s210 = smul.addr %s207, 32
      %s211 = sadd.s32 %s209, %s210
      %s212 = smul.addr %s211, 4
      %s213 = scalar_lea.vmem %s0, %s212
      %p214 = pneg %p56
      %p215 = pneg %p53
      %s216 = smul.u32 32, %s21
      %p217 = scmp.lt.s32.totalorder %s19, 3
      %s218 = scalar_select %p217, %s19, 3
      %p219 = scmp.lt.s32.totalorder %s216, 31
      %s220 = scalar_select %p219, %s216, 31
      %s221 = smul.addr %s218, 32
      %s222 = sadd.s32 %s220, %s221
      %s223 = smul.addr %s222, 4
      %s224 = scalar_lea.vmem %s1, %s223
      %p225 = pneg %p84
      %p226 = pneg %p81
      %s227 = smul.u32 32, %s21
      %p228 = scmp.lt.s32.totalorder %s19, 3
      %s229 = scalar_select %p228, %s19, 3
      %p230 = scmp.lt.s32.totalorder %s227, 31
      %s231 = scalar_select %p230, %s227, 31
      %s232 = smul.addr %s229, 32
      %s233 = sadd.s32 %s231, %s232
      %s234 = smul.addr %s233, 4
      %s235 = scalar_lea.vmem %s2, %s234
      %p236 = pneg %p112
      %p237 = pneg %p109
      %p238 = pneg %p140
      %p239 = pneg %p137
      %s240 = smul.u32 32, %s20
      %p241 = scmp.lt.s32.totalorder %s19, 3
      %s242 = scalar_select %p241, %s19, 3
      %p243 = scmp.lt.s32.totalorder %s240, 31
      %s244 = scalar_select %p243, %s240, 31
      %s245 = smul.addr %s242, 32
      %s246 = sadd.s32 %s244, %s245
      %s247 = smul.addr %s246, 4
      %s248 = scalar_lea.vmem %s3, %s247
      %s249 = smul.u32 32, %s20
      %p250 = scmp.lt.s32.totalorder %s19, 3
      %s251 = scalar_select %p250, %s19, 3
      %p252 = scmp.lt.s32.totalorder %s249, 31
      %s253 = scalar_select %p252, %s249, 31
      %s254 = smul.addr %s251, 32
      %s255 = sadd.s32 %s253, %s254
      %s256 = smul.addr %s255, 4
      %s257 = scalar_lea.vmem %s0, %s256
      %s258 = smul.u32 32, %s20
      %s259 = smul.u32 32, %s21
      %p260 = scmp.lt.s32.totalorder %s19, 3
      %s261 = scalar_select %p260, %s19, 3
      %p262 = scmp.lt.s32.totalorder %s259, 31
      %s263 = scalar_select %p262, %s259, 31
      %s264 = smul.addr %s261, 32
      %s265 = sadd.s32 %s263, %s264
      %s266 = smul.addr %s265, 4
      %s267 = scalar_lea.vmem %s1, %s266
      %s268 = smul.u32 32, %s21
      %s269 = smul.u32 32, %s21
      %p270 = scmp.lt.s32.totalorder %s19, 3
      %s271 = scalar_select %p270, %s19, 3
      %p272 = scmp.lt.s32.totalorder %s269, 31
      %s273 = scalar_select %p272, %s269, 31
      %s274 = smul.addr %s271, 32
      %s275 = sadd.s32 %s273, %s274
      %s276 = smul.addr %s275, 4
      %s277 = scalar_lea.vmem %s2, %s276
      %s278 = smul.u32 32, %s21
      %s279 = smul.u32 32, %s20
      %p280 = scmp.lt.s32.totalorder %s19, 3
      %s281 = scalar_select %p280, %s19, 3
      %p282 = scmp.lt.s32.totalorder %s279, 31
      %s283 = scalar_select %p282, %s279, 31
      %s284 = smul.addr %s281, 32
      %s285 = sadd.s32 %s283, %s284
      %s286 = smul.addr %s285, 4
      %s287 = scalar_lea.vmem %s3, %s286
      %s288 = smul.u32 32, %s20
      %p290 = scmp.eq.s32.totalorder %s21, 0
      // Predicated region
      $region33: #{tpu_custom_call.1} parent=31 // pred_check
        %p291 = pneg %p290
      $region34: #{tpu_custom_call.1} parent=31 // pred_check_branch
        %293 = sbr.rel (%p291) target = $region36
      $region35: #{tpu_custom_call.1} parent=31 // pred_region
        %294 = vst [vmem:[#allocation3] sm:$0xff] -inf
        %295 = vst [vmem:[#allocation3 + $0x8] sm:$0xff] -inf
        %296 = vst [vmem:[#allocation3 + $0x10] sm:$0xff] -inf
        %297 = vst [vmem:[#allocation3 + $0x18] sm:$0xff] -inf
        %298 = vst [vmem:[#allocation3 + $0x20] sm:$0xff] -inf
        %299 = vst [vmem:[#allocation3 + $0x28] sm:$0xff] -inf
        %300 = vst [vmem:[#allocation3 + $0x30] sm:$0xff] -inf
        %301 = vst [vmem:[#allocation3 + $0x38] sm:$0xff] -inf
        %302 = vst [vmem:[#allocation3 + $0x40] sm:$0xff] -inf
        %303 = vst [vmem:[#allocation3 + $0x48] sm:$0xff] -inf
        %304 = vst [vmem:[#allocation3 + $0x50] sm:$0xff] -inf
        %305 = vst [vmem:[#allocation3 + $0x58] sm:$0xff] -inf
        %306 = vst [vmem:[#allocation3 + $0x60] sm:$0xff] -inf
        %307 = vst [vmem:[#allocation3 + $0x68] sm:$0xff] -inf
        %308 = vst [vmem:[#allocation3 + $0x70] sm:$0xff] -inf
        %309 = vst [vmem:[#allocation3 + $0x78] sm:$0xff] -inf
        %310 = vst [vmem:[#allocation3 + $0x80] sm:$0xff] -inf
        %311 = vst [vmem:[#allocation3 + $0x88] sm:$0xff] -inf
        %312 = vst [vmem:[#allocation3 + $0x90] sm:$0xff] -inf
        %313 = vst [vmem:[#allocation3 + $0x98] sm:$0xff] -inf
        %314 = vst [vmem:[#allocation3 + $0xa0] sm:$0xff] -inf
        %315 = vst [vmem:[#allocation3 + $0xa8] sm:$0xff] -inf
        %316 = vst [vmem:[#allocation3 + $0xb0] sm:$0xff] -inf
        %317 = vst [vmem:[#allocation3 + $0xb8] sm:$0xff] -inf
        %318 = vst [vmem:[#allocation3 + $0xc0] sm:$0xff] -inf
        %319 = vst [vmem:[#allocation3 + $0xc8] sm:$0xff] -inf
        %320 = vst [vmem:[#allocation3 + $0xd0] sm:$0xff] -inf
        %321 = vst [vmem:[#allocation3 + $0xd8] sm:$0xff] -inf
        %322 = vst [vmem:[#allocation3 + $0xe0] sm:$0xff] -inf
        %323 = vst [vmem:[#allocation3 + $0xe8] sm:$0xff] -inf
        %324 = vst [vmem:[#allocation3 + $0xf0] sm:$0xff] -inf
        %325 = vst [vmem:[#allocation3 + $0xf8] sm:$0xff] -inf
        %326 = vst [vmem:[#allocation4] sm:$0xff] 0.0
        %327 = vst [vmem:[#allocation4 + $0x8] sm:$0xff] 0.0
        %328 = vst [vmem:[#allocation4 + $0x10] sm:$0xff] 0.0
        %329 = vst [vmem:[#allocation4 + $0x18] sm:$0xff] 0.0
        %330 = vst [vmem:[#allocation4 + $0x20] sm:$0xff] 0.0
        %331 = vst [vmem:[#allocation4 + $0x28] sm:$0xff] 0.0
        %332 = vst [vmem:[#allocation4 + $0x30] sm:$0xff] 0.0
        %333 = vst [vmem:[#allocation4 + $0x38] sm:$0xff] 0.0
        %334 = vst [vmem:[#allocation4 + $0x40] sm:$0xff] 0.0
        %335 = vst [vmem:[#allocation4 + $0x48] sm:$0xff] 0.0
        %336 = vst [vmem:[#allocation4 + $0x50] sm:$0xff] 0.0
        %337 = vst [vmem:[#allocation4 + $0x58] sm:$0xff] 0.0
        %338 = vst [vmem:[#allocation4 + $0x60] sm:$0xff] 0.0
        %339 = vst [vmem:[#allocation4 + $0x68] sm:$0xff] 0.0
        %340 = vst [vmem:[#allocation4 + $0x70] sm:$0xff] 0.0
        %341 = vst [vmem:[#allocation4 + $0x78] sm:$0xff] 0.0
        %342 = vst [vmem:[#allocation4 + $0x80] sm:$0xff] 0.0
        %343 = vst [vmem:[#allocation4 + $0x88] sm:$0xff] 0.0
        %344 = vst [vmem:[#allocation4 + $0x90] sm:$0xff] 0.0
        %345 = vst [vmem:[#allocation4 + $0x98] sm:$0xff] 0.0
        %346 = vst [vmem:[#allocation4 + $0xa0] sm:$0xff] 0.0
        %347 = vst [vmem:[#allocation4 + $0xa8] sm:$0xff] 0.0
        %348 = vst [vmem:[#allocation4 + $0xb0] sm:$0xff] 0.0
        %349 = vst [vmem:[#allocation4 + $0xb8] sm:$0xff] 0.0
        %350 = vst [vmem:[#allocation4 + $0xc0] sm:$0xff] 0.0
        %351 = vst [vmem:[#allocation4 + $0xc8] sm:$0xff] 0.0
        %352 = vst [vmem:[#allocation4 + $0xd0] sm:$0xff] 0.0
        %353 = vst [vmem:[#allocation4 + $0xd8] sm:$0xff] 0.0
        %354 = vst [vmem:[#allocation4 + $0xe0] sm:$0xff] 0.0
        %355 = vst [vmem:[#allocation4 + $0xe8] sm:$0xff] 0.0
        %356 = vst [vmem:[#allocation4 + $0xf0] sm:$0xff] 0.0
        %357 = vst [vmem:[#allocation4 + $0xf8] sm:$0xff] 0.0
        %v358 = vld [vmem:[%s257] sm:$0xf]
        %v359 = vld [vmem:[%s257 + $0x4] sm:$0xf]
        %v360 = vld [vmem:[%s257 + $0x8] sm:$0xf]
        %v361 = vld [vmem:[%s257 + $0xc] sm:$0xf]
        %v362 = vld [vmem:[%s257 + $0x10] sm:$0xf]
        %v363 = vld [vmem:[%s257 + $0x14] sm:$0xf]
        %v364 = vld [vmem:[%s257 + $0x18] sm:$0xf]
        %v365 = vld [vmem:[%s257 + $0x1c] sm:$0xf]
        %v366 = vld [vmem:[%s257 + $0x20] sm:$0xf]
        %v367 = vld [vmem:[%s257 + $0x24] sm:$0xf]
        %v368 = vld [vmem:[%s257 + $0x28] sm:$0xf]
        %v369 = vld [vmem:[%s257 + $0x2c] sm:$0xf]
        %v370 = vld [vmem:[%s257 + $0x30] sm:$0xf]
        %v371 = vld [vmem:[%s257 + $0x34] sm:$0xf]
        %v372 = vld [vmem:[%s257 + $0x38] sm:$0xf]
        %v373 = vld [vmem:[%s257 + $0x3c] sm:$0xf]
        %v374 = vld [vmem:[%s257 + $0x40] sm:$0xf]
        %v375 = vld [vmem:[%s257 + $0x44] sm:$0xf]
        %v376 = vld [vmem:[%s257 + $0x48] sm:$0xf]
        %v377 = vld [vmem:[%s257 + $0x4c] sm:$0xf]
        %v378 = vld [vmem:[%s257 + $0x50] sm:$0xf]
        %v379 = vld [vmem:[%s257 + $0x54] sm:$0xf]
        %v380 = vld [vmem:[%s257 + $0x58] sm:$0xf]
        %v381 = vld [vmem:[%s257 + $0x5c] sm:$0xf]
        %v382 = vld [vmem:[%s257 + $0x60] sm:$0xf]
        %v383 = vld [vmem:[%s257 + $0x64] sm:$0xf]
        %v384 = vld [vmem:[%s257 + $0x68] sm:$0xf]
        %v385 = vld [vmem:[%s257 + $0x6c] sm:$0xf]
        %v386 = vld [vmem:[%s257 + $0x70] sm:$0xf]
        %v387 = vld [vmem:[%s257 + $0x74] sm:$0xf]
        %v388 = vld [vmem:[%s257 + $0x78] sm:$0xf]
        %v389 = vld [vmem:[%s257 + $0x7c] sm:$0xf]
        %v390 = vunpack.c.l.bf16 %v358
        %v391 = vunpack.c.l.bf16 %v359
        %v392 = vunpack.c.l.bf16 %v360
        %v393 = vunpack.c.l.bf16 %v361
        %v394 = vunpack.c.l.bf16 %v362
        %v395 = vunpack.c.l.bf16 %v363
        %v396 = vunpack.c.l.bf16 %v364
        %v397 = vunpack.c.l.bf16 %v365
        %v398 = vunpack.c.l.bf16 %v366
        %v399 = vunpack.c.l.bf16 %v367
        %v400 = vunpack.c.l.bf16 %v368
        %v401 = vunpack.c.l.bf16 %v369
        %v402 = vunpack.c.l.bf16 %v370
        %v403 = vunpack.c.l.bf16 %v371
        %v404 = vunpack.c.l.bf16 %v372
        %v405 = vunpack.c.l.bf16 %v373
        %v406 = vunpack.c.l.bf16 %v374
        %v407 = vunpack.c.l.bf16 %v375
        %v408 = vunpack.c.l.bf16 %v376
        %v409 = vunpack.c.l.bf16 %v377
        %v410 = vunpack.c.l.bf16 %v378
        %v411 = vunpack.c.l.bf16 %v379
        %v412 = vunpack.c.l.bf16 %v380
        %v413 = vunpack.c.l.bf16 %v381
        %v414 = vunpack.c.l.bf16 %v382
        %v415 = vunpack.c.l.bf16 %v383
        %v416 = vunpack.c.l.bf16 %v384
        %v417 = vunpack.c.l.bf16 %v385
        %v418 = vunpack.c.l.bf16 %v386
        %v419 = vunpack.c.l.bf16 %v387
        %v420 = vunpack.c.l.bf16 %v388
        %v421 = vunpack.c.l.bf16 %v389
        %v422 = vmul.f32 %v390, 0.18033688
        %v423 = vmul.f32 %v391, 0.18033688
        %v424 = vmul.f32 %v392, 0.18033688
        %v425 = vmul.f32 %v393, 0.18033688
        %v426 = vmul.f32 %v394, 0.18033688
        %v427 = vmul.f32 %v395, 0.18033688
        %v428 = vmul.f32 %v396, 0.18033688
        %v429 = vmul.f32 %v397, 0.18033688
        %v430 = vmul.f32 %v398, 0.18033688
        %v431 = vmul.f32 %v399, 0.18033688
        %v432 = vmul.f32 %v400, 0.18033688
        %v433 = vmul.f32 %v401, 0.18033688
        %v434 = vmul.f32 %v402, 0.18033688
        %v435 = vmul.f32 %v403, 0.18033688
        %v436 = vmul.f32 %v404, 0.18033688
        %v437 = vmul.f32 %v405, 0.18033688
        %v438 = vmul.f32 %v406, 0.18033688
        %v439 = vmul.f32 %v407, 0.18033688
        %v440 = vmul.f32 %v408, 0.18033688
        %v441 = vmul.f32 %v409, 0.18033688
        %v442 = vmul.f32 %v410, 0.18033688
        %v443 = vmul.f32 %v411, 0.18033688
        %v444 = vmul.f32 %v412, 0.18033688
        %v445 = vmul.f32 %v413, 0.18033688
        %v446 = vmul.f32 %v414, 0.18033688
        %v447 = vmul.f32 %v415, 0.18033688
        %v448 = vmul.f32 %v416, 0.18033688
        %v449 = vmul.f32 %v417, 0.18033688
        %v450 = vmul.f32 %v418, 0.18033688
        %v451 = vmul.f32 %v419, 0.18033688
        %v452 = vmul.f32 %v420, 0.18033688
        %v453 = vmul.f32 %v421, 0.18033688
        %v454 = vpack.c.bf16 %v423, %v422
        %v455 = vpack.c.bf16 %v425, %v424
        %v456 = vpack.c.bf16 %v427, %v426
        %v457 = vpack.c.bf16 %v429, %v428
        %v458 = vpack.c.bf16 %v431, %v430
        %v459 = vpack.c.bf16 %v433, %v432
        %v460 = vpack.c.bf16 %v435, %v434
        %v461 = vpack.c.bf16 %v437, %v436
        %v462 = vpack.c.bf16 %v439, %v438
        %v463 = vpack.c.bf16 %v441, %v440
        %v464 = vpack.c.bf16 %v443, %v442
        %v465 = vpack.c.bf16 %v445, %v444
        %v466 = vpack.c.bf16 %v447, %v446
        %v467 = vpack.c.bf16 %v449, %v448
        %v468 = vpack.c.bf16 %v451, %v450
        %v469 = vpack.c.bf16 %v453, %v452
        %vm470 = vcmask 523264
        %471 = vst.msk [vmem:[#allocation2] sm:$0xff] %vm470, %v454
        %472 = vst.msk [vmem:[#allocation2 + $0x8] sm:$0xff] %vm470, %v455
        %473 = vst.msk [vmem:[#allocation2 + $0x10] sm:$0xff] %vm470, %v456
        %474 = vst.msk [vmem:[#allocation2 + $0x18] sm:$0xff] %vm470, %v457
        %475 = vst.msk [vmem:[#allocation2 + $0x20] sm:$0xff] %vm470, %v458
        %476 = vst.msk [vmem:[#allocation2 + $0x28] sm:$0xff] %vm470, %v459
        %477 = vst.msk [vmem:[#allocation2 + $0x30] sm:$0xff] %vm470, %v460
        %478 = vst.msk [vmem:[#allocation2 + $0x38] sm:$0xff] %vm470, %v461
        %479 = vst.msk [vmem:[#allocation2 + $0x40] sm:$0xff] %vm470, %v462
        %480 = vst.msk [vmem:[#allocation2 + $0x48] sm:$0xff] %vm470, %v463
        %481 = vst.msk [vmem:[#allocation2 + $0x50] sm:$0xff] %vm470, %v464
        %482 = vst.msk [vmem:[#allocation2 + $0x58] sm:$0xff] %vm470, %v465
        %483 = vst.msk [vmem:[#allocation2 + $0x60] sm:$0xff] %vm470, %v466
        %484 = vst.msk [vmem:[#allocation2 + $0x68] sm:$0xff] %vm470, %v467
        %485 = vst.msk [vmem:[#allocation2 + $0x70] sm:$0xff] %vm470, %v468
        %486 = vst.msk [vmem:[#allocation2 + $0x78] sm:$0xff] %vm470, %v469
        %v487 = vlaneseq
        %v488 = vand.u32 %v487, 127
        %vm489 = vcmp.eq.s32.totalorder %v488, 64
        %v490 = vsel %vm489, 1, 0
        %v491 = vcvt.s32.f32 %v490
        %v492 = vpack.c.bf16 %v491, %v491
        %493 = vst [vmem:[#allocation5] sm:$0xff] %v492
        %494 = vst [vmem:[#allocation5 + $0x8] sm:$0xff] %v492
        %495 = vst [vmem:[#allocation5 + $0x10] sm:$0xff] %v492
        %496 = vst [vmem:[#allocation5 + $0x18] sm:$0xff] %v492
        %497 = vst [vmem:[#allocation5 + $0x20] sm:$0xff] %v492
        %498 = vst [vmem:[#allocation5 + $0x28] sm:$0xff] %v492
        %499 = vst [vmem:[#allocation5 + $0x30] sm:$0xff] %v492
        %500 = vst [vmem:[#allocation5 + $0x38] sm:$0xff] %v492
        %501 = vst [vmem:[#allocation5 + $0x40] sm:$0xff] %v492
        %502 = vst [vmem:[#allocation5 + $0x48] sm:$0xff] %v492
        %503 = vst [vmem:[#allocation5 + $0x50] sm:$0xff] %v492
        %504 = vst [vmem:[#allocation5 + $0x58] sm:$0xff] %v492
        %505 = vst [vmem:[#allocation5 + $0x60] sm:$0xff] %v492
        %506 = vst [vmem:[#allocation5 + $0x68] sm:$0xff] %v492
        %507 = vst [vmem:[#allocation5 + $0x70] sm:$0xff] %v492
        %508 = vst [vmem:[#allocation5 + $0x78] sm:$0xff] %v492
      $region36: #{tpu_custom_call.1} parent=31 // pred_fallthru
        _
      %v509 = vld [vmem:[#allocation2] sm:$0xff]
      %v510 = vld [vmem:[#allocation2 + $0x8] sm:$0xff]
      %v511 = vld [vmem:[#allocation2 + $0x10] sm:$0xff]
      %v512 = vld [vmem:[#allocation2 + $0x18] sm:$0xff]
      %v513 = vld [vmem:[#allocation2 + $0x20] sm:$0xff]
      %v514 = vld [vmem:[#allocation2 + $0x28] sm:$0xff]
      %v515 = vld [vmem:[#allocation2 + $0x30] sm:$0xff]
      %v516 = vld [vmem:[#allocation2 + $0x38] sm:$0xff]
      %v517 = vld [vmem:[#allocation2 + $0x40] sm:$0xff]
      %v518 = vld [vmem:[#allocation2 + $0x48] sm:$0xff]
      %v519 = vld [vmem:[#allocation2 + $0x50] sm:$0xff]
      %v520 = vld [vmem:[#allocation2 + $0x58] sm:$0xff]
      %v521 = vld [vmem:[#allocation2 + $0x60] sm:$0xff]
      %v522 = vld [vmem:[#allocation2 + $0x68] sm:$0xff]
      %v523 = vld [vmem:[#allocation2 + $0x70] sm:$0xff]
      %v524 = vld [vmem:[#allocation2 + $0x78] sm:$0xff]
      %v525 = vld [vmem:[%s267] sm:$0xf]
      %v526 = vld [vmem:[%s267 + $0x4] sm:$0xf]
      %v527 = vld [vmem:[%s267 + $0x8] sm:$0xf]
      %v528 = vld [vmem:[%s267 + $0xc] sm:$0xf]
      %v529 = vld [vmem:[%s267 + $0x10] sm:$0xf]
      %v530 = vld [vmem:[%s267 + $0x14] sm:$0xf]
      %v531 = vld [vmem:[%s267 + $0x18] sm:$0xf]
      %v532 = vld [vmem:[%s267 + $0x1c] sm:$0xf]
      %v533 = vld [vmem:[%s267 + $0x20] sm:$0xf]
      %v534 = vld [vmem:[%s267 + $0x24] sm:$0xf]
      %v535 = vld [vmem:[%s267 + $0x28] sm:$0xf]
      %v536 = vld [vmem:[%s267 + $0x2c] sm:$0xf]
      %v537 = vld [vmem:[%s267 + $0x30] sm:$0xf]
      %v538 = vld [vmem:[%s267 + $0x34] sm:$0xf]
      %v539 = vld [vmem:[%s267 + $0x38] sm:$0xf]
      %v540 = vld [vmem:[%s267 + $0x3c] sm:$0xf]
      %v541 = vld [vmem:[%s267 + $0x40] sm:$0xf]
      %v542 = vld [vmem:[%s267 + $0x44] sm:$0xf]
      %v543 = vld [vmem:[%s267 + $0x48] sm:$0xf]
      %v544 = vld [vmem:[%s267 + $0x4c] sm:$0xf]
      %v545 = vld [vmem:[%s267 + $0x50] sm:$0xf]
      %v546 = vld [vmem:[%s267 + $0x54] sm:$0xf]
      %v547 = vld [vmem:[%s267 + $0x58] sm:$0xf]
      %v548 = vld [vmem:[%s267 + $0x5c] sm:$0xf]
      %v549 = vld [vmem:[%s267 + $0x60] sm:$0xf]
      %v550 = vld [vmem:[%s267 + $0x64] sm:$0xf]
      %v551 = vld [vmem:[%s267 + $0x68] sm:$0xf]
      %v552 = vld [vmem:[%s267 + $0x6c] sm:$0xf]
      %v553 = vld [vmem:[%s267 + $0x70] sm:$0xf]
      %v554 = vld [vmem:[%s267 + $0x74] sm:$0xf]
      %v555 = vld [vmem:[%s267 + $0x78] sm:$0xf]
      %v556 = vld [vmem:[%s267 + $0x7c] sm:$0xf]
      %v589 = vunpack.c.l.b16 %v525
      %v590 = vunpack.c.l.b16 %v526
      %v591 = vunpack.c.l.b16 %v527
      %v592 = vunpack.c.l.b16 %v528
      %v593 = vunpack.c.l.b16 %v529
      %v594 = vunpack.c.l.b16 %v530
      %v595 = vunpack.c.l.b16 %v531
      %v596 = vunpack.c.l.b16 %v532
      %v597 = vunpack.c.l.b16 %v533
      %v598 = vunpack.c.l.b16 %v534
      %v599 = vunpack.c.l.b16 %v535
      %v600 = vunpack.c.l.b16 %v536
      %v601 = vunpack.c.l.b16 %v537
      %v602 = vunpack.c.l.b16 %v538
      %v603 = vunpack.c.l.b16 %v539
      %v604 = vunpack.c.l.b16 %v540
      %v605 = vunpack.c.l.b16 %v541
      %v606 = vunpack.c.l.b16 %v542
      %v607 = vunpack.c.l.b16 %v543
      %v608 = vunpack.c.l.b16 %v544
      %v609 = vunpack.c.l.b16 %v545
      %v610 = vunpack.c.l.b16 %v546
      %v611 = vunpack.c.l.b16 %v547
      %v612 = vunpack.c.l.b16 %v548
      %v613 = vunpack.c.l.b16 %v549
      %v614 = vunpack.c.l.b16 %v550
      %v615 = vunpack.c.l.b16 %v551
      %v616 = vunpack.c.l.b16 %v552
      %v617 = vunpack.c.l.b16 %v553
      %v618 = vunpack.c.l.b16 %v554
      %v619 = vunpack.c.l.b16 %v555
      %v620 = vunpack.c.l.b16 %v556
      %v621 = vpack.c.b16 %v590, %v589
      %v622 = vpack.c.b16 %v592, %v591
      %v623 = vpack.c.b16 %v594, %v593
      %v624 = vpack.c.b16 %v596, %v595
      %v625 = vpack.c.b16 %v598, %v597
      %v626 = vpack.c.b16 %v600, %v599
      %v627 = vpack.c.b16 %v602, %v601
      %v628 = vpack.c.b16 %v604, %v603
      %v629 = vpack.c.b16 %v606, %v605
      %v630 = vpack.c.b16 %v608, %v607
      %v631 = vpack.c.b16 %v610, %v609
      %v632 = vpack.c.b16 %v612, %v611
      %v633 = vpack.c.b16 %v614, %v613
      %v634 = vpack.c.b16 %v616, %v615
      %v635 = vpack.c.b16 %v618, %v617
      %v636 = vpack.c.b16 %v620, %v619
      %vm637 = vcmask 523264
      %v639 = vsel %vm637, %v509, 0
      %v642 = vsel %vm637, %v510, 0
      %v645 = vsel %vm637, %v511, 0
      %v648 = vsel %vm637, %v512, 0
      %v651 = vsel %vm637, %v513, 0
      %v654 = vsel %vm637, %v514, 0
      %v657 = vsel %vm637, %v515, 0
      %v660 = vsel %vm637, %v516, 0
      %v663 = vsel %vm637, %v517, 0
      %v666 = vsel %vm637, %v518, 0
      %v669 = vsel %vm637, %v519, 0
      %v672 = vsel %vm637, %v520, 0
      %v675 = vsel %vm637, %v521, 0
      %v678 = vsel %vm637, %v522, 0
      %v681 = vsel %vm637, %v523, 0
      %v684 = vsel %vm637, %v524, 0
      %v687 = vsel %vm637, %v621, 0
      %v690 = vsel %vm637, %v622, 0
      %v693 = vsel %vm637, %v623, 0
      %v696 = vsel %vm637, %v624, 0
      %v699 = vsel %vm637, %v625, 0
      %v702 = vsel %vm637, %v626, 0
      %v705 = vsel %vm637, %v627, 0
      %v708 = vsel %vm637, %v628, 0
      %v711 = vsel %vm637, %v629, 0
      %v714 = vsel %vm637, %v630, 0
      %v717 = vsel %vm637, %v631, 0
      %v720 = vsel %vm637, %v632, 0
      %v723 = vsel %vm637, %v633, 0
      %v726 = vsel %vm637, %v634, 0
      %v729 = vsel %vm637, %v635, 0
      %v732 = vsel %vm637, %v636, 0
      %734 = vmatprep.subr.bf16.mxu0 0
      %735 = vmatpush1.bf16.xpose.msra.mxu0 %v687
      %736 = vmatprep.subr.bf16.mxu0 0
      %737 = vmatpush1.bf16.xpose.msra.mxu0 %v690
      %738 = vmatprep.subr.bf16.mxu0 0
      %739 = vmatpush1.bf16.xpose.msra.mxu0 %v693
      %740 = vmatprep.subr.bf16.mxu0 0
      %741 = vmatpush1.bf16.xpose.msra.mxu0 %v696
      %742 = vmatprep.subr.bf16.mxu0 0
      %743 = vmatpush1.bf16.xpose.msra.mxu0 %v699
      %744 = vmatprep.subr.bf16.mxu0 0
      %745 = vmatpush1.bf16.xpose.msra.mxu0 %v702
      %746 = vmatprep.subr.bf16.mxu0 0
      %747 = vmatpush1.bf16.xpose.msra.mxu0 %v705
      %748 = vmatprep.subr.bf16.mxu0 0
      %749 = vmatpush1.bf16.xpose.msra.mxu0 %v708
      %750 = vmatprep.subr.bf16.mxu0 0
      %751 = vmatpush1.bf16.xpose.msra.mxu0 %v711
      %752 = vmatprep.subr.bf16.mxu0 0
      %753 = vmatpush1.bf16.xpose.msra.mxu0 %v714
      %754 = vmatprep.subr.bf16.mxu0 0
      %755 = vmatpush1.bf16.xpose.msra.mxu0 %v717
      %756 = vmatprep.subr.bf16.mxu0 0
      %757 = vmatpush1.bf16.xpose.msra.mxu0 %v720
      %758 = vmatprep.subr.bf16.mxu0 0
      %759 = vmatpush1.bf16.xpose.msra.mxu0 %v723
      %760 = vmatprep.subr.bf16.mxu0 0
      %761 = vmatpush1.bf16.xpose.msra.mxu0 %v726
      %762 = vmatprep.subr.bf16.mxu0 0
      %763 = vmatpush1.bf16.xpose.msra.mxu0 %v729
      %764 = vmatprep.subr.bf16.mxu0 0
      %765 = vmatpush1.bf16.xpose.msra.mxu0 %v732
      %766 = vmatprep.mubr.bf16.mxu0 0
      %767 = vmatmul.mubr.bf16.gmra.mrb[0].mxu0 %v639
      %v768 = vpop.f32.mrb[0].mxu0
      %v769 = vadd.f32 0.0, %v768
      %v770 = vpop.f32.mrb[0].mxu0
      %v771 = vadd.f32 0.0, %v770
      %v772 = vpop.f32.mrb[0].mxu0
      %v773 = vadd.f32 0.0, %v772
      %v774 = vpop.f32.mrb[0].mxu0
      %v775 = vadd.f32 0.0, %v774
      %776 = vmatprep.mubr.bf16.mxu0 0
      %777 = vmatmul.mubr.bf16.gmra.mrb[0].mxu0 %v642
      %v778 = vpop.f32.mrb[0].mxu0
      %v779 = vadd.f32 0.0, %v778
      %v780 = vpop.f32.mrb[0].mxu0
      %v781 = vadd.f32 0.0, %v780
      %v782 = vpop.f32.mrb[0].mxu0
      %v783 = vadd.f32 0.0, %v782
      %v784 = vpop.f32.mrb[0].mxu0
      %v785 = vadd.f32 0.0, %v784
      %786 = vmatprep.mubr.bf16.mxu0 0
      %787 = vmatmul.mubr.bf16.gmra.mrb[0].mxu0 %v645
      %v788 = vpop.f32.mrb[0].mxu0
      %v789 = vadd.f32 0.0, %v788
      %v790 = vpop.f32.mrb[0].mxu0
      %v791 = vadd.f32 0.0, %v790
      %v792 = vpop.f32.mrb[0].mxu0
      %v793 = vadd.f32 0.0, %v792
      %v794 = vpop.f32.mrb[0].mxu0
      %v795 = vadd.f32 0.0, %v794
      %796 = vmatprep.mubr.bf16.mxu0 0
      %797 = vmatmul.mubr.bf16.gmra.mrb[0].mxu0 %v648
      %v798 = vpop.f32.mrb[0].mxu0
      %v799 = vadd.f32 0.0, %v798
      %v800 = vpop.f32.mrb[0].mxu0
      %v801 = vadd.f32 0.0, %v800
      %v802 = vpop.f32.mrb[0].mxu0
      %v803 = vadd.f32 0.0, %v802
      %v804 = vpop.f32.mrb[0].mxu0
      %v805 = vadd.f32 0.0, %v804
      %806 = vmatprep.mubr.bf16.mxu0 0
      %807 = vmatmul.mubr.bf16.gmra.mrb[0].mxu0 %v651
      %v808 = vpop.f32.mrb[0].mxu0
      %v809 = vadd.f32 0.0, %v808
      %v810 = vpop.f32.mrb[0].mxu0
      %v811 = vadd.f32 0.0, %v810
      %v812 = vpop.f32.mrb[0].mxu0
      %v813 = vadd.f32 0.0, %v812
      %v814 = vpop.f32.mrb[0].mxu0
      %v815 = vadd.f32 0.0, %v814
      %816 = vmatprep.mubr.bf16.mxu0 0
      %817 = vmatmul.mubr.bf16.gmra.mrb[0].mxu0 %v654
      %v818 = vpop.f32.mrb[0].mxu0
      %v819 = vadd.f32 0.0, %v818
      %v820 = vpop.f32.mrb[0].mxu0
      %v821 = vadd.f32 0.0, %v820
      %v822 = vpop.f32.mrb[0].mxu0
      %v823 = vadd.f32 0.0, %v822
      %v824 = vpop.f32.mrb[0].mxu0
      %v825 = vadd.f32 0.0, %v824
      %826 = vmatprep.mubr.bf16.mxu0 0
      %827 = vmatmul.mubr.bf16.gmra.mrb[0].mxu0 %v657
      %v828 = vpop.f32.mrb[0].mxu0
      %v829 = vadd.f32 0.0, %v828
      %v830 = vpop.f32.mrb[0].mxu0
      %v831 = vadd.f32 0.0, %v830
      %v832 = vpop.f32.mrb[0].mxu0
      %v833 = vadd.f32 0.0, %v832
      %v834 = vpop.f32.mrb[0].mxu0
      %v835 = vadd.f32 0.0, %v834
      %836 = vmatprep.mubr.bf16.mxu0 0
      %837 = vmatmul.mubr.bf16.gmra.mrb[0].mxu0 %v660
      %v838 = vpop.f32.mrb[0].mxu0
      %v839 = vadd.f32 0.0, %v838
      %v840 = vpop.f32.mrb[0].mxu0
      %v841 = vadd.f32 0.0, %v840
      %v842 = vpop.f32.mrb[0].mxu0
      %v843 = vadd.f32 0.0, %v842
      %v844 = vpop.f32.mrb[0].mxu0
      %v845 = vadd.f32 0.0, %v844
      %846 = vmatprep.mubr.bf16.mxu0 0
      %847 = vmatmul.mubr.bf16.gmra.mrb[0].mxu0 %v663
      %v848 = vpop.f32.mrb[0].mxu0
      %v849 = vadd.f32 0.0, %v848
      %v850 = vpop.f32.mrb[0].mxu0
      %v851 = vadd.f32 0.0, %v850
      %v852 = vpop.f32.mrb[0].mxu0
      %v853 = vadd.f32 0.0, %v852
      %v854 = vpop.f32.mrb[0].mxu0
      %v855 = vadd.f32 0.0, %v854
      %856 = vmatprep.mubr.bf16.mxu0 0
      %857 = vmatmul.mubr.bf16.gmra.mrb[0].mxu0 %v666
      %v858 = vpop.f32.mrb[0].mxu0
      %v859 = vadd.f32 0.0, %v858
      %v860 = vpop.f32.mrb[0].mxu0
      %v861 = vadd.f32 0.0, %v860
      %v862 = vpop.f32.mrb[0].mxu0
      %v863 = vadd.f32 0.0, %v862
      %v864 = vpop.f32.mrb[0].mxu0
      %v865 = vadd.f32 0.0, %v864
      %866 = vmatprep.mubr.bf16.mxu0 0
      %867 = vmatmul.mubr.bf16.gmra.mrb[0].mxu0 %v669
      %v868 = vpop.f32.mrb[0].mxu0
      %v869 = vadd.f32 0.0, %v868
      %v870 = vpop.f32.mrb[0].mxu0
      %v871 = vadd.f32 0.0, %v870
      %v872 = vpop.f32.mrb[0].mxu0
      %v873 = vadd.f32 0.0, %v872
      %v874 = vpop.f32.mrb[0].mxu0
      %v875 = vadd.f32 0.0, %v874
      %876 = vmatprep.mubr.bf16.mxu0 0
      %877 = vmatmul.mubr.bf16.gmra.mrb[0].mxu0 %v672
      %v878 = vpop.f32.mrb[0].mxu0
      %v879 = vadd.f32 0.0, %v878
      %v880 = vpop.f32.mrb[0].mxu0
      %v881 = vadd.f32 0.0, %v880
      %v882 = vpop.f32.mrb[0].mxu0
      %v883 = vadd.f32 0.0, %v882
      %v884 = vpop.f32.mrb[0].mxu0
      %v885 = vadd.f32 0.0, %v884
      %886 = vmatprep.mubr.bf16.mxu0 0
      %887 = vmatmul.mubr.bf16.gmra.mrb[0].mxu0 %v675
      %v888 = vpop.f32.mrb[0].mxu0
      %v889 = vadd.f32 0.0, %v888
      %v890 = vpop.f32.mrb[0].mxu0
      %v891 = vadd.f32 0.0, %v890
      %v892 = vpop.f32.mrb[0].mxu0
      %v893 = vadd.f32 0.0, %v892
      %v894 = vpop.f32.mrb[0].mxu0
      %v895 = vadd.f32 0.0, %v894
      %896 = vmatprep.mubr.bf16.mxu0 0
      %897 = vmatmul.mubr.bf16.gmra.mrb[0].mxu0 %v678
      %v898 = vpop.f32.mrb[0].mxu0
      %v899 = vadd.f32 0.0, %v898
      %v900 = vpop.f32.mrb[0].mxu0
      %v901 = vadd.f32 0.0, %v900
      %v902 = vpop.f32.mrb[0].mxu0
      %v903 = vadd.f32 0.0, %v902
      %v904 = vpop.f32.mrb[0].mxu0
      %v905 = vadd.f32 0.0, %v904
      %906 = vmatprep.mubr.bf16.mxu0 0
      %907 = vmatmul.mubr.bf16.gmra.mrb[0].mxu0 %v681
      %v908 = vpop.f32.mrb[0].mxu0
      %v909 = vadd.f32 0.0, %v908
      %v910 = vpop.f32.mrb[0].mxu0
      %v911 = vadd.f32 0.0, %v910
      %v912 = vpop.f32.mrb[0].mxu0
      %v913 = vadd.f32 0.0, %v912
      %v914 = vpop.f32.mrb[0].mxu0
      %v915 = vadd.f32 0.0, %v914
      %916 = vmatprep.mubr.bf16.mxu0 0
      %917 = vmatmul.mubr.bf16.gmra.mrb[0].mxu0 %v684
      %v918 = vpop.f32.mrb[0].mxu0
      %v919 = vadd.f32 0.0, %v918
      %v920 = vpop.f32.mrb[0].mxu0
      %v921 = vadd.f32 0.0, %v920
      %v922 = vpop.f32.mrb[0].mxu0
      %v923 = vadd.f32 0.0, %v922
      %v924 = vpop.f32.mrb[0].mxu0
      %v925 = vadd.f32 0.0, %v924
      %926 = vdwg.mxu0
      %v927 = vld [vmem:[#allocation3] sm:$0xff]
      %v928 = vld [vmem:[#allocation3 + $0x8] sm:$0xff]
      %v929 = vld [vmem:[#allocation3 + $0x10] sm:$0xff]
      %v930 = vld [vmem:[#allocation3 + $0x18] sm:$0xff]
      %v931 = vld [vmem:[#allocation3 + $0x20] sm:$0xff]
      %v932 = vld [vmem:[#allocation3 + $0x28] sm:$0xff]
      %v933 = vld [vmem:[#allocation3 + $0x30] sm:$0xff]
      %v934 = vld [vmem:[#allocation3 + $0x38] sm:$0xff]
      %v935 = vld [vmem:[#allocation3 + $0x40] sm:$0xff]
      %v936 = vld [vmem:[#allocation3 + $0x48] sm:$0xff]
      %v937 = vld [vmem:[#allocation3 + $0x50] sm:$0xff]
      %v938 = vld [vmem:[#allocation3 + $0x58] sm:$0xff]
      %v939 = vld [vmem:[#allocation3 + $0x60] sm:$0xff]
      %v940 = vld [vmem:[#allocation3 + $0x68] sm:$0xff]
      %v941 = vld [vmem:[#allocation3 + $0x70] sm:$0xff]
      %v942 = vld [vmem:[#allocation3 + $0x78] sm:$0xff]
      %v943 = vld [vmem:[#allocation3 + $0x80] sm:$0xff]
      %v944 = vld [vmem:[#allocation3 + $0x88] sm:$0xff]
      %v945 = vld [vmem:[#allocation3 + $0x90] sm:$0xff]
      %v946 = vld [vmem:[#allocation3 + $0x98] sm:$0xff]
      %v947 = vld [vmem:[#allocation3 + $0xa0] sm:$0xff]
      %v948 = vld [vmem:[#allocation3 + $0xa8] sm:$0xff]
      %v949 = vld [vmem:[#allocation3 + $0xb0] sm:$0xff]
      %v950 = vld [vmem:[#allocation3 + $0xb8] sm:$0xff]
      %v951 = vld [vmem:[#allocation3 + $0xc0] sm:$0xff]
      %v952 = vld [vmem:[#allocation3 + $0xc8] sm:$0xff]
      %v953 = vld [vmem:[#allocation3 + $0xd0] sm:$0xff]
      %v954 = vld [vmem:[#allocation3 + $0xd8] sm:$0xff]
      %v955 = vld [vmem:[#allocation3 + $0xe0] sm:$0xff]
      %v956 = vld [vmem:[#allocation3 + $0xe8] sm:$0xff]
      %v957 = vld [vmem:[#allocation3 + $0xf0] sm:$0xff]
      %v958 = vld [vmem:[#allocation3 + $0xf8] sm:$0xff]
      %v959 = vmax.f32 %v769, %v771
      %960 = vmax.xlane.f32.xlu0 %v959
      %v961 = vpop.xlane.xlu0 %960
      %v962 = vmax.f32 %v773, %v775
      %963 = vmax.xlane.f32.xlu0 %v962
      %v964 = vpop.xlane.xlu0 %963
      %v965 = vmax.f32 %v779, %v781
      %966 = vmax.xlane.f32.xlu0 %v965
      %v967 = vpop.xlane.xlu0 %966
      %v968 = vmax.f32 %v783, %v785
      %969 = vmax.xlane.f32.xlu0 %v968
      %v970 = vpop.xlane.xlu0 %969
      %v971 = vmax.f32 %v789, %v791
      %972 = vmax.xlane.f32.xlu0 %v971
      %v973 = vpop.xlane.xlu0 %972
      %v974 = vmax.f32 %v793, %v795
      %975 = vmax.xlane.f32.xlu0 %v974
      %v976 = vpop.xlane.xlu0 %975
      %v977 = vmax.f32 %v799, %v801
      %978 = vmax.xlane.f32.xlu0 %v977
      %v979 = vpop.xlane.xlu0 %978
      %v980 = vmax.f32 %v803, %v805
      %981 = vmax.xlane.f32.xlu0 %v980
      %v982 = vpop.xlane.xlu0 %981
      %v983 = vmax.f32 %v809, %v811
      %984 = vmax.xlane.f32.xlu0 %v983
      %v985 = vpop.xlane.xlu0 %984
      %v986 = vmax.f32 %v813, %v815
      %987 = vmax.xlane.f32.xlu0 %v986
      %v988 = vpop.xlane.xlu0 %987
      %v989 = vmax.f32 %v819, %v821
      %990 = vmax.xlane.f32.xlu0 %v989
      %v991 = vpop.xlane.xlu0 %990
      %v992 = vmax.f32 %v823, %v825
      %993 = vmax.xlane.f32.xlu0 %v992
      %v994 = vpop.xlane.xlu0 %993
      %v995 = vmax.f32 %v829, %v831
      %996 = vmax.xlane.f32.xlu0 %v995
      %v997 = vpop.xlane.xlu0 %996
      %v998 = vmax.f32 %v833, %v835
      %999 = vmax.xlane.f32.xlu0 %v998
      %v1000 = vpop.xlane.xlu0 %999
      %v1001 = vmax.f32 %v839, %v841
      %1002 = vmax.xlane.f32.xlu0 %v1001
      %v1003 = vpop.xlane.xlu0 %1002
      %v1004 = vmax.f32 %v843, %v845
      %1005 = vmax.xlane.f32.xlu0 %v1004
      %v1006 = vpop.xlane.xlu0 %1005
      %v1007 = vmax.f32 %v849, %v851
      %1008 = vmax.xlane.f32.xlu0 %v1007
      %v1009 = vpop.xlane.xlu0 %1008
      %v1010 = vmax.f32 %v853, %v855
      %1011 = vmax.xlane.f32.xlu0 %v1010
      %v1012 = vpop.xlane.xlu0 %1011
      %v1013 = vmax.f32 %v859, %v861
      %1014 = vmax.xlane.f32.xlu0 %v1013
      %v1015 = vpop.xlane.xlu0 %1014
      %v1016 = vmax.f32 %v863, %v865
      %1017 = vmax.xlane.f32.xlu0 %v1016
      %v1018 = vpop.xlane.xlu0 %1017
      %v1019 = vmax.f32 %v869, %v871
      %1020 = vmax.xlane.f32.xlu0 %v1019
      %v1021 = vpop.xlane.xlu0 %1020
      %v1022 = vmax.f32 %v873, %v875
      %1023 = vmax.xlane.f32.xlu0 %v1022
      %v1024 = vpop.xlane.xlu0 %1023
      %v1025 = vmax.f32 %v879, %v881
      %1026 = vmax.xlane.f32.xlu0 %v1025
      %v1027 = vpop.xlane.xlu0 %1026
      %v1028 = vmax.f32 %v883, %v885
      %1029 = vmax.xlane.f32.xlu0 %v1028
      %v1030 = vpop.xlane.xlu0 %1029
      %v1031 = vmax.f32 %v889, %v891
      %1032 = vmax.xlane.f32.xlu0 %v1031
      %v1033 = vpop.xlane.xlu0 %1032
      %v1034 = vmax.f32 %v893, %v895
      %1035 = vmax.xlane.f32.xlu0 %v1034
      %v1036 = vpop.xlane.xlu0 %1035
      %v1037 = vmax.f32 %v899, %v901
      %1038 = vmax.xlane.f32.xlu0 %v1037
      %v1039 = vpop.xlane.xlu0 %1038
      %v1040 = vmax.f32 %v903, %v905
      %1041 = vmax.xlane.f32.xlu0 %v1040
      %v1042 = vpop.xlane.xlu0 %1041
      %v1043 = vmax.f32 %v909, %v911
      %1044 = vmax.xlane.f32.xlu0 %v1043
      %v1045 = vpop.xlane.xlu0 %1044
      %v1046 = vmax.f32 %v913, %v915
      %1047 = vmax.xlane.f32.xlu0 %v1046
      %v1048 = vpop.xlane.xlu0 %1047
      %v1049 = vmax.f32 %v919, %v921
      %1050 = vmax.xlane.f32.xlu0 %v1049
      %v1051 = vpop.xlane.xlu0 %1050
      %v1052 = vmax.f32 %v923, %v925
      %1053 = vmax.xlane.f32.xlu0 %v1052
      %v1054 = vpop.xlane.xlu0 %1053
      %v1055 = vmax.f32 %v927, %v961
      %v1056 = vmax.f32 %v928, %v964
      %v1057 = vmax.f32 %v929, %v967
      %v1058 = vmax.f32 %v930, %v970
      %v1059 = vmax.f32 %v931, %v973
      %v1060 = vmax.f32 %v932, %v976
      %v1061 = vmax.f32 %v933, %v979
      %v1062 = vmax.f32 %v934, %v982
      %v1063 = vmax.f32 %v935, %v985
      %v1064 = vmax.f32 %v936, %v988
      %v1065 = vmax.f32 %v937, %v991
      %v1066 = vmax.f32 %v938, %v994
      %v1067 = vmax.f32 %v939, %v997
      %v1068 = vmax.f32 %v940, %v1000
      %v1069 = vmax.f32 %v941, %v1003
      %v1070 = vmax.f32 %v942, %v1006
      %v1071 = vmax.f32 %v943, %v1009
      %v1072 = vmax.f32 %v944, %v1012
      %v1073 = vmax.f32 %v945, %v1015
      %v1074 = vmax.f32 %v946, %v1018
      %v1075 = vmax.f32 %v947, %v1021
      %v1076 = vmax.f32 %v948, %v1024
      %v1077 = vmax.f32 %v949, %v1027
      %v1078 = vmax.f32 %v950, %v1030
      %v1079 = vmax.f32 %v951, %v1033
      %v1080 = vmax.f32 %v952, %v1036
      %v1081 = vmax.f32 %v953, %v1039
      %v1082 = vmax.f32 %v954, %v1042
      %v1083 = vmax.f32 %v955, %v1045
      %v1084 = vmax.f32 %v956, %v1048
      %v1085 = vmax.f32 %v957, %v1051
      %v1086 = vmax.f32 %v958, %v1054
      %v1087 = vsub.f32 %v927, %v1055
      %v1088 = vsub.f32 %v928, %v1056
      %v1089 = vsub.f32 %v929, %v1057
      %v1090 = vsub.f32 %v930, %v1058
      %v1091 = vsub.f32 %v931, %v1059
      %v1092 = vsub.f32 %v932, %v1060
      %v1093 = vsub.f32 %v933, %v1061
      %v1094 = vsub.f32 %v934, %v1062
      %v1095 = vsub.f32 %v935, %v1063
      %v1096 = vsub.f32 %v936, %v1064
      %v1097 = vsub.f32 %v937, %v1065
      %v1098 = vsub.f32 %v938, %v1066
      %v1099 = vsub.f32 %v939, %v1067
      %v1100 = vsub.f32 %v940, %v1068
      %v1101 = vsub.f32 %v941, %v1069
      %v1102 = vsub.f32 %v942, %v1070
      %v1103 = vsub.f32 %v943, %v1071
      %v1104 = vsub.f32 %v944, %v1072
      %v1105 = vsub.f32 %v945, %v1073
      %v1106 = vsub.f32 %v946, %v1074
      %v1107 = vsub.f32 %v947, %v1075
      %v1108 = vsub.f32 %v948, %v1076
      %v1109 = vsub.f32 %v949, %v1077
      %v1110 = vsub.f32 %v950, %v1078
      %v1111 = vsub.f32 %v951, %v1079
      %v1112 = vsub.f32 %v952, %v1080
      %v1113 = vsub.f32 %v953, %v1081
      %v1114 = vsub.f32 %v954, %v1082
      %v1115 = vsub.f32 %v955, %v1083
      %v1116 = vsub.f32 %v956, %v1084
      %v1117 = vsub.f32 %v957, %v1085
      %v1118 = vsub.f32 %v958, %v1086
      %v1119 = vpow.pop %v1087
      %v1120 = vpow.pop %v1088
      %v1121 = vpow.pop %v1089
      %v1122 = vpow.pop %v1090
      %v1123 = vpow.pop %v1091
      %v1124 = vpow.pop %v1092
      %v1125 = vpow.pop %v1093
      %v1126 = vpow.pop %v1094
      %v1127 = vpow.pop %v1095
      %v1128 = vpow.pop %v1096
      %v1129 = vpow.pop %v1097
      %v1130 = vpow.pop %v1098
      %v1131 = vpow.pop %v1099
      %v1132 = vpow.pop %v1100
      %v1133 = vpow.pop %v1101
      %v1134 = vpow.pop %v1102
      %v1135 = vpow.pop %v1103
      %v1136 = vpow.pop %v1104
      %v1137 = vpow.pop %v1105
      %v1138 = vpow.pop %v1106
      %v1139 = vpow.pop %v1107
      %v1140 = vpow.pop %v1108
      %v1141 = vpow.pop %v1109
      %v1142 = vpow.pop %v1110
      %v1143 = vpow.pop %v1111
      %v1144 = vpow.pop %v1112
      %v1145 = vpow.pop %v1113
      %v1146 = vpow.pop %v1114
      %v1147 = vpow.pop %v1115
      %v1148 = vpow.pop %v1116
      %v1149 = vpow.pop %v1117
      %v1150 = vpow.pop %v1118
      %1151 = vst [vmem:[#allocation3] sm:$0xff] %v1055
      %1152 = vst [vmem:[#allocation3 + $0x8] sm:$0xff] %v1056
      %1153 = vst [vmem:[#allocation3 + $0x10] sm:$0xff] %v1057
      %1154 = vst [vmem:[#allocation3 + $0x18] sm:$0xff] %v1058
      %1155 = vst [vmem:[#allocation3 + $0x20] sm:$0xff] %v1059
      %1156 = vst [vmem:[#allocation3 + $0x28] sm:$0xff] %v1060
      %1157 = vst [vmem:[#allocation3 + $0x30] sm:$0xff] %v1061
      %1158 = vst [vmem:[#allocation3 + $0x38] sm:$0xff] %v1062
      %1159 = vst [vmem:[#allocation3 + $0x40] sm:$0xff] %v1063
      %1160 = vst [vmem:[#allocation3 + $0x48] sm:$0xff] %v1064
      %1161 = vst [vmem:[#allocation3 + $0x50] sm:$0xff] %v1065
      %1162 = vst [vmem:[#allocation3 + $0x58] sm:$0xff] %v1066
      %1163 = vst [vmem:[#allocation3 + $0x60] sm:$0xff] %v1067
      %1164 = vst [vmem:[#allocation3 + $0x68] sm:$0xff] %v1068
      %1165 = vst [vmem:[#allocation3 + $0x70] sm:$0xff] %v1069
      %1166 = vst [vmem:[#allocation3 + $0x78] sm:$0xff] %v1070
      %1167 = vst [vmem:[#allocation3 + $0x80] sm:$0xff] %v1071
      %1168 = vst [vmem:[#allocation3 + $0x88] sm:$0xff] %v1072
      %1169 = vst [vmem:[#allocation3 + $0x90] sm:$0xff] %v1073
      %1170 = vst [vmem:[#allocation3 + $0x98] sm:$0xff] %v1074
      %1171 = vst [vmem:[#allocation3 + $0xa0] sm:$0xff] %v1075
      %1172 = vst [vmem:[#allocation3 + $0xa8] sm:$0xff] %v1076
      %1173 = vst [vmem:[#allocation3 + $0xb0] sm:$0xff] %v1077
      %1174 = vst [vmem:[#allocation3 + $0xb8] sm:$0xff] %v1078
      %1175 = vst [vmem:[#allocation3 + $0xc0] sm:$0xff] %v1079
      %1176 = vst [vmem:[#allocation3 + $0xc8] sm:$0xff] %v1080
      %1177 = vst [vmem:[#allocation3 + $0xd0] sm:$0xff] %v1081
      %1178 = vst [vmem:[#allocation3 + $0xd8] sm:$0xff] %v1082
      %1179 = vst [vmem:[#allocation3 + $0xe0] sm:$0xff] %v1083
      %1180 = vst [vmem:[#allocation3 + $0xe8] sm:$0xff] %v1084
      %1181 = vst [vmem:[#allocation3 + $0xf0] sm:$0xff] %v1085
      %1182 = vst [vmem:[#allocation3 + $0xf8] sm:$0xff] %v1086
      %v1183 = vsub.f32 %v769, %v1055
      %v1184 = vsub.f32 %v771, %v1055
      %v1185 = vsub.f32 %v773, %v1056
      %v1186 = vsub.f32 %v775, %v1056
      %v1187 = vsub.f32 %v779, %v1057
      %v1188 = vsub.f32 %v781, %v1057
      %v1189 = vsub.f32 %v783, %v1058
      %v1190 = vsub.f32 %v785, %v1058
      %v1191 = vsub.f32 %v789, %v1059
      %v1192 = vsub.f32 %v791, %v1059
      %v1193 = vsub.f32 %v793, %v1060
      %v1194 = vsub.f32 %v795, %v1060
      %v1195 = vsub.f32 %v799, %v1061
      %v1196 = vsub.f32 %v801, %v1061
      %v1197 = vsub.f32 %v803, %v1062
      %v1198 = vsub.f32 %v805, %v1062
      %v1199 = vsub.f32 %v809, %v1063
      %v1200 = vsub.f32 %v811, %v1063
      %v1201 = vsub.f32 %v813, %v1064
      %v1202 = vsub.f32 %v815, %v1064
      %v1203 = vsub.f32 %v819, %v1065
      %v1204 = vsub.f32 %v821, %v1065
      %v1205 = vsub.f32 %v823, %v1066
      %v1206 = vsub.f32 %v825, %v1066
      %v1207 = vsub.f32 %v829, %v1067
      %v1208 = vsub.f32 %v831, %v1067
      %v1209 = vsub.f32 %v833, %v1068
      %v1210 = vsub.f32 %v835, %v1068
      %v1211 = vsub.f32 %v839, %v1069
      %v1212 = vsub.f32 %v841, %v1069
      %v1213 = vsub.f32 %v843, %v1070
      %v1214 = vsub.f32 %v845, %v1070
      %v1215 = vsub.f32 %v849, %v1071
      %v1216 = vsub.f32 %v851, %v1071
      %v1217 = vsub.f32 %v853, %v1072
      %v1218 = vsub.f32 %v855, %v1072
      %v1219 = vsub.f32 %v859, %v1073
      %v1220 = vsub.f32 %v861, %v1073
      %v1221 = vsub.f32 %v863, %v1074
      %v1222 = vsub.f32 %v865, %v1074
      %v1223 = vsub.f32 %v869, %v1075
      %v1224 = vsub.f32 %v871, %v1075
      %v1225 = vsub.f32 %v873, %v1076
      %v1226 = vsub.f32 %v875, %v1076
      %v1227 = vsub.f32 %v879, %v1077
      %v1228 = vsub.f32 %v881, %v1077
      %v1229 = vsub.f32 %v883, %v1078
      %v1230 = vsub.f32 %v885, %v1078
      %v1231 = vsub.f32 %v889, %v1079
      %v1232 = vsub.f32 %v891, %v1079
      %v1233 = vsub.f32 %v893, %v1080
      %v1234 = vsub.f32 %v895, %v1080
      %v1235 = vsub.f32 %v899, %v1081
      %v1236 = vsub.f32 %v901, %v1081
      %v1237 = vsub.f32 %v903, %v1082
      %v1238 = vsub.f32 %v905, %v1082
      %v1239 = vsub.f32 %v909, %v1083
      %v1240 = vsub.f32 %v911, %v1083
      %v1241 = vsub.f32 %v913, %v1084
      %v1242 = vsub.f32 %v915, %v1084
      %v1243 = vsub.f32 %v919, %v1085
      %v1244 = vsub.f32 %v921, %v1085
      %v1245 = vsub.f32 %v923, %v1086
      %v1246 = vsub.f32 %v925, %v1086
      %v1247 = vpack.c.bf16 %v1185, %v1183
      %v1248 = vpack.c.bf16 %v1186, %v1184
      %v1249 = vpack.c.bf16 %v1189, %v1187
      %v1250 = vpack.c.bf16 %v1190, %v1188
      %v1251 = vpack.c.bf16 %v1193, %v1191
      %v1252 = vpack.c.bf16 %v1194, %v1192
      %v1253 = vpack.c.bf16 %v1197, %v1195
      %v1254 = vpack.c.bf16 %v1198, %v1196
      %v1255 = vpack.c.bf16 %v1201, %v1199
      %v1256 = vpack.c.bf16 %v1202, %v1200
      %v1257 = vpack.c.bf16 %v1205, %v1203
      %v1258 = vpack.c.bf16 %v1206, %v1204
      %v1259 = vpack.c.bf16 %v1209, %v1207
      %v1260 = vpack.c.bf16 %v1210, %v1208
      %v1261 = vpack.c.bf16 %v1213, %v1211
      %v1262 = vpack.c.bf16 %v1214, %v1212
      %v1263 = vpack.c.bf16 %v1217, %v1215
      %v1264 = vpack.c.bf16 %v1218, %v1216
      %v1265 = vpack.c.bf16 %v1221, %v1219
      %v1266 = vpack.c.bf16 %v1222, %v1220
      %v1267 = vpack.c.bf16 %v1225, %v1223
      %v1268 = vpack.c.bf16 %v1226, %v1224
      %v1269 = vpack.c.bf16 %v1229, %v1227
      %v1270 = vpack.c.bf16 %v1230, %v1228
      %v1271 = vpack.c.bf16 %v1233, %v1231
      %v1272 = vpack.c.bf16 %v1234, %v1232
      %v1273 = vpack.c.bf16 %v1237, %v1235
      %v1274 = vpack.c.bf16 %v1238, %v1236
      %v1275 = vpack.c.bf16 %v1241, %v1239
      %v1276 = vpack.c.bf16 %v1242, %v1240
      %v1277 = vpack.c.bf16 %v1245, %v1243
      %v1278 = vpack.c.bf16 %v1246, %v1244
      %v1279 = vpow.bf16.pop %v1247
      %v1280 = vpow.bf16.pop %v1248
      %v1281 = vpow.bf16.pop %v1249
      %v1282 = vpow.bf16.pop %v1250
      %v1283 = vpow.bf16.pop %v1251
      %v1284 = vpow.bf16.pop %v1252
      %v1285 = vpow.bf16.pop %v1253
      %v1286 = vpow.bf16.pop %v1254
      %v1287 = vpow.bf16.pop %v1255
      %v1288 = vpow.bf16.pop %v1256
      %v1289 = vpow.bf16.pop %v1257
      %v1290 = vpow.bf16.pop %v1258
      %v1291 = vpow.bf16.pop %v1259
      %v1292 = vpow.bf16.pop %v1260
      %v1293 = vpow.bf16.pop %v1261
      %v1294 = vpow.bf16.pop %v1262
      %v1295 = vpow.bf16.pop %v1263
      %v1296 = vpow.bf16.pop %v1264
      %v1297 = vpow.bf16.pop %v1265
      %v1298 = vpow.bf16.pop %v1266
      %v1299 = vpow.bf16.pop %v1267
      %v1300 = vpow.bf16.pop %v1268
      %v1301 = vpow.bf16.pop %v1269
      %v1302 = vpow.bf16.pop %v1270
      %v1303 = vpow.bf16.pop %v1271
      %v1304 = vpow.bf16.pop %v1272
      %v1305 = vpow.bf16.pop %v1273
      %v1306 = vpow.bf16.pop %v1274
      %v1307 = vpow.bf16.pop %v1275
      %v1308 = vpow.bf16.pop %v1276
      %v1309 = vpow.bf16.pop %v1277
      %v1310 = vpow.bf16.pop %v1278
      %v1311 = vld [vmem:[%s277] sm:$0xf]
      %v1312 = vld [vmem:[%s277 + $0x4] sm:$0xf]
      %v1313 = vld [vmem:[%s277 + $0x8] sm:$0xf]
      %v1314 = vld [vmem:[%s277 + $0xc] sm:$0xf]
      %v1315 = vld [vmem:[%s277 + $0x10] sm:$0xf]
      %v1316 = vld [vmem:[%s277 + $0x14] sm:$0xf]
      %v1317 = vld [vmem:[%s277 + $0x18] sm:$0xf]
      %v1318 = vld [vmem:[%s277 + $0x1c] sm:$0xf]
      %v1319 = vld [vmem:[%s277 + $0x20] sm:$0xf]
      %v1320 = vld [vmem:[%s277 + $0x24] sm:$0xf]
      %v1321 = vld [vmem:[%s277 + $0x28] sm:$0xf]
      %v1322 = vld [vmem:[%s277 + $0x2c] sm:$0xf]
      %v1323 = vld [vmem:[%s277 + $0x30] sm:$0xf]
      %v1324 = vld [vmem:[%s277 + $0x34] sm:$0xf]
      %v1325 = vld [vmem:[%s277 + $0x38] sm:$0xf]
      %v1326 = vld [vmem:[%s277 + $0x3c] sm:$0xf]
      %v1327 = vld [vmem:[%s277 + $0x40] sm:$0xf]
      %v1328 = vld [vmem:[%s277 + $0x44] sm:$0xf]
      %v1329 = vld [vmem:[%s277 + $0x48] sm:$0xf]
      %v1330 = vld [vmem:[%s277 + $0x4c] sm:$0xf]
      %v1331 = vld [vmem:[%s277 + $0x50] sm:$0xf]
      %v1332 = vld [vmem:[%s277 + $0x54] sm:$0xf]
      %v1333 = vld [vmem:[%s277 + $0x58] sm:$0xf]
      %v1334 = vld [vmem:[%s277 + $0x5c] sm:$0xf]
      %v1335 = vld [vmem:[%s277 + $0x60] sm:$0xf]
      %v1336 = vld [vmem:[%s277 + $0x64] sm:$0xf]
      %v1337 = vld [vmem:[%s277 + $0x68] sm:$0xf]
      %v1338 = vld [vmem:[%s277 + $0x6c] sm:$0xf]
      %v1339 = vld [vmem:[%s277 + $0x70] sm:$0xf]
      %v1340 = vld [vmem:[%s277 + $0x74] sm:$0xf]
      %v1341 = vld [vmem:[%s277 + $0x78] sm:$0xf]
      %v1342 = vld [vmem:[%s277 + $0x7c] sm:$0xf]
      %v1375 = vunpack.c.l.b16 %v1311
      %v1376 = vunpack.c.l.b16 %v1312
      %v1377 = vunpack.c.l.b16 %v1313
      %v1378 = vunpack.c.l.b16 %v1314
      %v1379 = vunpack.c.l.b16 %v1315
      %v1380 = vunpack.c.l.b16 %v1316
      %v1381 = vunpack.c.l.b16 %v1317
      %v1382 = vunpack.c.l.b16 %v1318
      %v1383 = vunpack.c.l.b16 %v1319
      %v1384 = vunpack.c.l.b16 %v1320
      %v1385 = vunpack.c.l.b16 %v1321
      %v1386 = vunpack.c.l.b16 %v1322
      %v1387 = vunpack.c.l.b16 %v1323
      %v1388 = vunpack.c.l.b16 %v1324
      %v1389 = vunpack.c.l.b16 %v1325
      %v1390 = vunpack.c.l.b16 %v1326
      %v1391 = vunpack.c.l.b16 %v1327
      %v1392 = vunpack.c.l.b16 %v1328
      %v1393 = vunpack.c.l.b16 %v1329
      %v1394 = vunpack.c.l.b16 %v1330
      %v1395 = vunpack.c.l.b16 %v1331
      %v1396 = vunpack.c.l.b16 %v1332
      %v1397 = vunpack.c.l.b16 %v1333
      %v1398 = vunpack.c.l.b16 %v1334
      %v1399 = vunpack.c.l.b16 %v1335
      %v1400 = vunpack.c.l.b16 %v1336
      %v1401 = vunpack.c.l.b16 %v1337
      %v1402 = vunpack.c.l.b16 %v1338
      %v1403 = vunpack.c.l.b16 %v1339
      %v1404 = vunpack.c.l.b16 %v1340
      %v1405 = vunpack.c.l.b16 %v1341
      %v1406 = vunpack.c.l.b16 %v1342
      %v1407 = vpack.c.b16 %v1376, %v1375
      %v1408 = vpack.c.b16 %v1378, %v1377
      %v1409 = vpack.c.b16 %v1380, %v1379
      %v1410 = vpack.c.b16 %v1382, %v1381
      %v1411 = vpack.c.b16 %v1384, %v1383
      %v1412 = vpack.c.b16 %v1386, %v1385
      %v1413 = vpack.c.b16 %v1388, %v1387
      %v1414 = vpack.c.b16 %v1390, %v1389
      %v1415 = vpack.c.b16 %v1392, %v1391
      %v1416 = vpack.c.b16 %v1394, %v1393
      %v1417 = vpack.c.b16 %v1396, %v1395
      %v1418 = vpack.c.b16 %v1398, %v1397
      %v1419 = vpack.c.b16 %v1400, %v1399
      %v1420 = vpack.c.b16 %v1402, %v1401
      %v1421 = vpack.c.b16 %v1404, %v1403
      %v1422 = vpack.c.b16 %v1406, %v1405
      %1439 = vst.msk [vmem:[#allocation5] sm:$0xff] %vm637, %v1407
      %1440 = vst.msk [vmem:[#allocation5 + $0x8] sm:$0xff] %vm637, %v1408
      %1441 = vst.msk [vmem:[#allocation5 + $0x10] sm:$0xff] %vm637, %v1409
      %1442 = vst.msk [vmem:[#allocation5 + $0x18] sm:$0xff] %vm637, %v1410
      %1443 = vst.msk [vmem:[#allocation5 + $0x20] sm:$0xff] %vm637, %v1411
      %1444 = vst.msk [vmem:[#allocation5 + $0x28] sm:$0xff] %vm637, %v1412
      %1445 = vst.msk [vmem:[#allocation5 + $0x30] sm:$0xff] %vm637, %v1413
      %1446 = vst.msk [vmem:[#allocation5 + $0x38] sm:$0xff] %vm637, %v1414
      %1447 = vst.msk [vmem:[#allocation5 + $0x40] sm:$0xff] %vm637, %v1415
      %1448 = vst.msk [vmem:[#allocation5 + $0x48] sm:$0xff] %vm637, %v1416
      %1449 = vst.msk [vmem:[#allocation5 + $0x50] sm:$0xff] %vm637, %v1417
      %1450 = vst.msk [vmem:[#allocation5 + $0x58] sm:$0xff] %vm637, %v1418
      %1451 = vst.msk [vmem:[#allocation5 + $0x60] sm:$0xff] %vm637, %v1419
      %1452 = vst.msk [vmem:[#allocation5 + $0x68] sm:$0xff] %vm637, %v1420
      %1453 = vst.msk [vmem:[#allocation5 + $0x70] sm:$0xff] %vm637, %v1421
      %1454 = vst.msk [vmem:[#allocation5 + $0x78] sm:$0xff] %vm637, %v1422
      %v1455 = vld [vmem:[#allocation4] sm:$0xff]
      %v1456 = vld [vmem:[#allocation4 + $0x8] sm:$0xff]
      %v1457 = vld [vmem:[#allocation4 + $0x10] sm:$0xff]
      %v1458 = vld [vmem:[#allocation4 + $0x18] sm:$0xff]
      %v1459 = vld [vmem:[#allocation4 + $0x20] sm:$0xff]
      %v1460 = vld [vmem:[#allocation4 + $0x28] sm:$0xff]
      %v1461 = vld [vmem:[#allocation4 + $0x30] sm:$0xff]
      %v1462 = vld [vmem:[#allocation4 + $0x38] sm:$0xff]
      %v1463 = vld [vmem:[#allocation4 + $0x40] sm:$0xff]
      %v1464 = vld [vmem:[#allocation4 + $0x48] sm:$0xff]
      %v1465 = vld [vmem:[#allocation4 + $0x50] sm:$0xff]
      %v1466 = vld [vmem:[#allocation4 + $0x58] sm:$0xff]
      %v1467 = vld [vmem:[#allocation4 + $0x60] sm:$0xff]
      %v1468 = vld [vmem:[#allocation4 + $0x68] sm:$0xff]
      %v1469 = vld [vmem:[#allocation4 + $0x70] sm:$0xff]
      %v1470 = vld [vmem:[#allocation4 + $0x78] sm:$0xff]
      %v1471 = vld [vmem:[#allocation4 + $0x80] sm:$0xff]
      %v1472 = vld [vmem:[#allocation4 + $0x88] sm:$0xff]
      %v1473 = vld [vmem:[#allocation4 + $0x90] sm:$0xff]
      %v1474 = vld [vmem:[#allocation4 + $0x98] sm:$0xff]
      %v1475 = vld [vmem:[#allocation4 + $0xa0] sm:$0xff]
      %v1476 = vld [vmem:[#allocation4 + $0xa8] sm:$0xff]
      %v1477 = vld [vmem:[#allocation4 + $0xb0] sm:$0xff]
      %v1478 = vld [vmem:[#allocation4 + $0xb8] sm:$0xff]
      %v1479 = vld [vmem:[#allocation4 + $0xc0] sm:$0xff]
      %v1480 = vld [vmem:[#allocation4 + $0xc8] sm:$0xff]
      %v1481 = vld [vmem:[#allocation4 + $0xd0] sm:$0xff]
      %v1482 = vld [vmem:[#allocation4 + $0xd8] sm:$0xff]
      %v1483 = vld [vmem:[#allocation4 + $0xe0] sm:$0xff]
      %v1484 = vld [vmem:[#allocation4 + $0xe8] sm:$0xff]
      %v1485 = vld [vmem:[#allocation4 + $0xf0] sm:$0xff]
      %v1486 = vld [vmem:[#allocation4 + $0xf8] sm:$0xff]
      %v1487 = vmul.f32 %v1455, %v1119
      %v1488 = vmul.f32 %v1456, %v1120
      %v1489 = vmul.f32 %v1457, %v1121
      %v1490 = vmul.f32 %v1458, %v1122
      %v1491 = vmul.f32 %v1459, %v1123
      %v1492 = vmul.f32 %v1460, %v1124
      %v1493 = vmul.f32 %v1461, %v1125
      %v1494 = vmul.f32 %v1462, %v1126
      %v1495 = vmul.f32 %v1463, %v1127
      %v1496 = vmul.f32 %v1464, %v1128
      %v1497 = vmul.f32 %v1465, %v1129
      %v1498 = vmul.f32 %v1466, %v1130
      %v1499 = vmul.f32 %v1467, %v1131
      %v1500 = vmul.f32 %v1468, %v1132
      %v1501 = vmul.f32 %v1469, %v1133
      %v1502 = vmul.f32 %v1470, %v1134
      %v1503 = vmul.f32 %v1471, %v1135
      %v1504 = vmul.f32 %v1472, %v1136
      %v1505 = vmul.f32 %v1473, %v1137
      %v1506 = vmul.f32 %v1474, %v1138
      %v1507 = vmul.f32 %v1475, %v1139
      %v1508 = vmul.f32 %v1476, %v1140
      %v1509 = vmul.f32 %v1477, %v1141
      %v1510 = vmul.f32 %v1478, %v1142
      %v1511 = vmul.f32 %v1479, %v1143
      %v1512 = vmul.f32 %v1480, %v1144
      %v1513 = vmul.f32 %v1481, %v1145
      %v1514 = vmul.f32 %v1482, %v1146
      %v1515 = vmul.f32 %v1483, %v1147
      %v1516 = vmul.f32 %v1484, %v1148
      %v1517 = vmul.f32 %v1485, %v1149
      %v1518 = vmul.f32 %v1486, %v1150
      %v1519 = vld [vmem:[#allocation5] sm:$0xff]
      %v1520 = vld [vmem:[#allocation5 + $0x8] sm:$0xff]
      %v1521 = vld [vmem:[#allocation5 + $0x10] sm:$0xff]
      %v1522 = vld [vmem:[#allocation5 + $0x18] sm:$0xff]
      %v1523 = vld [vmem:[#allocation5 + $0x20] sm:$0xff]
      %v1524 = vld [vmem:[#allocation5 + $0x28] sm:$0xff]
      %v1525 = vld [vmem:[#allocation5 + $0x30] sm:$0xff]
      %v1526 = vld [vmem:[#allocation5 + $0x38] sm:$0xff]
      %v1527 = vld [vmem:[#allocation5 + $0x40] sm:$0xff]
      %v1528 = vld [vmem:[#allocation5 + $0x48] sm:$0xff]
      %v1529 = vld [vmem:[#allocation5 + $0x50] sm:$0xff]
      %v1530 = vld [vmem:[#allocation5 + $0x58] sm:$0xff]
      %v1531 = vld [vmem:[#allocation5 + $0x60] sm:$0xff]
      %v1532 = vld [vmem:[#allocation5 + $0x68] sm:$0xff]
      %v1533 = vld [vmem:[#allocation5 + $0x70] sm:$0xff]
      %v1534 = vld [vmem:[#allocation5 + $0x78] sm:$0xff]
      %1535 = vmatprep.subr.bf16.mxu0 0
      %1536 = vmatpush1.bf16.msra.mxu0 %v1519
      %1537 = vmatprep.subr.bf16.mxu0 0
      %1538 = vmatpush1.bf16.msra.mxu0 %v1520
      %1539 = vmatprep.subr.bf16.mxu0 0
      %1540 = vmatpush1.bf16.msra.mxu0 %v1521
      %1541 = vmatprep.subr.bf16.mxu0 0
      %1542 = vmatpush1.bf16.msra.mxu0 %v1522
      %1543 = vmatprep.subr.bf16.mxu0 0
      %1544 = vmatpush1.bf16.msra.mxu0 %v1523
      %1545 = vmatprep.subr.bf16.mxu0 0
      %1546 = vmatpush1.bf16.msra.mxu0 %v1524
      %1547 = vmatprep.subr.bf16.mxu0 0
      %1548 = vmatpush1.bf16.msra.mxu0 %v1525
      %1549 = vmatprep.subr.bf16.mxu0 0
      %1550 = vmatpush1.bf16.msra.mxu0 %v1526
      %1551 = vmatprep.subr.bf16.mxu0 0
      %1552 = vmatpush1.bf16.msra.mxu0 %v1527
      %1553 = vmatprep.subr.bf16.mxu0 0
      %1554 = vmatpush1.bf16.msra.mxu0 %v1528
      %1555 = vmatprep.subr.bf16.mxu0 0
      %1556 = vmatpush1.bf16.msra.mxu0 %v1529
      %1557 = vmatprep.subr.bf16.mxu0 0
      %1558 = vmatpush1.bf16.msra.mxu0 %v1530
      %1559 = vmatprep.subr.bf16.mxu0 0
      %1560 = vmatpush1.bf16.msra.mxu0 %v1531
      %1561 = vmatprep.subr.bf16.mxu0 0
      %1562 = vmatpush1.bf16.msra.mxu0 %v1532
      %1563 = vmatprep.subr.bf16.mxu0 0
      %1564 = vmatpush1.bf16.msra.mxu0 %v1533
      %1565 = vmatprep.subr.bf16.mxu0 0
      %1566 = vmatpush1.bf16.msra.mxu0 %v1534
      %1567 = vmatprep.mubr.bf16.mxu0 %v1280
      %1568 = vmatmul.mubr.bf16.gmra.mrb[0].mxu0 %v1279
      %v1569 = vpop.f32.mrb[0].mxu0
      %v1570 = vadd.f32 0.0, %v1569
      %v1571 = vpop.f32.mrb[0].mxu0
      %v1572 = vpop.f32.mrb[0].mxu0
      %v1573 = vadd.f32 0.0, %v1572
      %v1574 = vpop.f32.mrb[0].mxu0
      %1575 = vmatprep.mubr.bf16.mxu0 %v1282
      %1576 = vmatmul.mubr.bf16.gmra.mrb[0].mxu0 %v1281
      %v1577 = vpop.f32.mrb[0].mxu0
      %v1578 = vadd.f32 0.0, %v1577
      %v1579 = vpop.f32.mrb[0].mxu0
      %v1580 = vpop.f32.mrb[0].mxu0
      %v1581 = vadd.f32 0.0, %v1580
      %v1582 = vpop.f32.mrb[0].mxu0
      %1583 = vmatprep.mubr.bf16.mxu0 %v1284
      %1584 = vmatmul.mubr.bf16.gmra.mrb[0].mxu0 %v1283
      %v1585 = vpop.f32.mrb[0].mxu0
      %v1586 = vadd.f32 0.0, %v1585
      %v1587 = vpop.f32.mrb[0].mxu0
      %v1588 = vpop.f32.mrb[0].mxu0
      %v1589 = vadd.f32 0.0, %v1588
      %v1590 = vpop.f32.mrb[0].mxu0
      %1591 = vmatprep.mubr.bf16.mxu0 %v1286
      %1592 = vmatmul.mubr.bf16.gmra.mrb[0].mxu0 %v1285
      %v1593 = vpop.f32.mrb[0].mxu0
      %v1594 = vadd.f32 0.0, %v1593
      %v1595 = vpop.f32.mrb[0].mxu0
      %v1596 = vpop.f32.mrb[0].mxu0
      %v1597 = vadd.f32 0.0, %v1596
      %v1598 = vpop.f32.mrb[0].mxu0
      %1599 = vmatprep.mubr.bf16.mxu0 %v1288
      %1600 = vmatmul.mubr.bf16.gmra.mrb[0].mxu0 %v1287
      %v1601 = vpop.f32.mrb[0].mxu0
      %v1602 = vadd.f32 0.0, %v1601
      %v1603 = vpop.f32.mrb[0].mxu0
      %v1604 = vpop.f32.mrb[0].mxu0
      %v1605 = vadd.f32 0.0, %v1604
      %v1606 = vpop.f32.mrb[0].mxu0
      %1607 = vmatprep.mubr.bf16.mxu0 %v1290
      %1608 = vmatmul.mubr.bf16.gmra.mrb[0].mxu0 %v1289
      %v1609 = vpop.f32.mrb[0].mxu0
      %v1610 = vadd.f32 0.0, %v1609
      %v1611 = vpop.f32.mrb[0].mxu0
      %v1612 = vpop.f32.mrb[0].mxu0
      %v1613 = vadd.f32 0.0, %v1612
      %v1614 = vpop.f32.mrb[0].mxu0
      %1615 = vmatprep.mubr.bf16.mxu0 %v1292
      %1616 = vmatmul.mubr.bf16.gmra.mrb[0].mxu0 %v1291
      %v1617 = vpop.f32.mrb[0].mxu0
      %v1618 = vadd.f32 0.0, %v1617
      %v1619 = vpop.f32.mrb[0].mxu0
      %v1620 = vpop.f32.mrb[0].mxu0
      %v1621 = vadd.f32 0.0, %v1620
      %v1622 = vpop.f32.mrb[0].mxu0
      %1623 = vmatprep.mubr.bf16.mxu0 %v1294
      %1624 = vmatmul.mubr.bf16.gmra.mrb[0].mxu0 %v1293
      %v1625 = vpop.f32.mrb[0].mxu0
      %v1626 = vadd.f32 0.0, %v1625
      %v1627 = vpop.f32.mrb[0].mxu0
      %v1628 = vpop.f32.mrb[0].mxu0
      %v1629 = vadd.f32 0.0, %v1628
      %v1630 = vpop.f32.mrb[0].mxu0
      %1631 = vmatprep.mubr.bf16.mxu0 %v1296
      %1632 = vmatmul.mubr.bf16.gmra.mrb[0].mxu0 %v1295
      %v1633 = vpop.f32.mrb[0].mxu0
      %v1634 = vadd.f32 0.0, %v1633
      %v1635 = vpop.f32.mrb[0].mxu0
      %v1636 = vpop.f32.mrb[0].mxu0
      %v1637 = vadd.f32 0.0, %v1636
      %v1638 = vpop.f32.mrb[0].mxu0
      %1639 = vmatprep.mubr.bf16.mxu0 %v1298
      %1640 = vmatmul.mubr.bf16.gmra.mrb[0].mxu0 %v1297
      %v1641 = vpop.f32.mrb[0].mxu0
      %v1642 = vadd.f32 0.0, %v1641
      %v1643 = vpop.f32.mrb[0].mxu0
      %v1644 = vpop.f32.mrb[0].mxu0
      %v1645 = vadd.f32 0.0, %v1644
      %v1646 = vpop.f32.mrb[0].mxu0
      %1647 = vmatprep.mubr.bf16.mxu0 %v1300
      %1648 = vmatmul.mubr.bf16.gmra.mrb[0].mxu0 %v1299
      %v1649 = vpop.f32.mrb[0].mxu0
      %v1650 = vadd.f32 0.0, %v1649
      %v1651 = vpop.f32.mrb[0].mxu0
      %v1652 = vpop.f32.mrb[0].mxu0
      %v1653 = vadd.f32 0.0, %v1652
      %v1654 = vpop.f32.mrb[0].mxu0
      %1655 = vmatprep.mubr.bf16.mxu0 %v1302
      %1656 = vmatmul.mubr.bf16.gmra.mrb[0].mxu0 %v1301
      %v1657 = vpop.f32.mrb[0].mxu0
      %v1658 = vadd.f32 0.0, %v1657
      %v1659 = vpop.f32.mrb[0].mxu0
      %v1660 = vpop.f32.mrb[0].mxu0
      %v1661 = vadd.f32 0.0, %v1660
      %v1662 = vpop.f32.mrb[0].mxu0
      %1663 = vmatprep.mubr.bf16.mxu0 %v1304
      %1664 = vmatmul.mubr.bf16.gmra.mrb[0].mxu0 %v1303
      %v1665 = vpop.f32.mrb[0].mxu0
      %v1666 = vadd.f32 0.0, %v1665
      %v1667 = vpop.f32.mrb[0].mxu0
      %v1668 = vpop.f32.mrb[0].mxu0
      %v1669 = vadd.f32 0.0, %v1668
      %v1670 = vpop.f32.mrb[0].mxu0
      %1671 = vmatprep.mubr.bf16.mxu0 %v1306
      %1672 = vmatmul.mubr.bf16.gmra.mrb[0].mxu0 %v1305
      %v1673 = vpop.f32.mrb[0].mxu0
      %v1674 = vadd.f32 0.0, %v1673
      %v1675 = vpop.f32.mrb[0].mxu0
      %v1676 = vpop.f32.mrb[0].mxu0
      %v1677 = vadd.f32 0.0, %v1676
      %v1678 = vpop.f32.mrb[0].mxu0
      %1679 = vmatprep.mubr.bf16.mxu0 %v1308
      %1680 = vmatmul.mubr.bf16.gmra.mrb[0].mxu0 %v1307
      %v1681 = vpop.f32.mrb[0].mxu0
      %v1682 = vadd.f32 0.0, %v1681
      %v1683 = vpop.f32.mrb[0].mxu0
      %v1684 = vpop.f32.mrb[0].mxu0
      %v1685 = vadd.f32 0.0, %v1684
      %v1686 = vpop.f32.mrb[0].mxu0
      %1687 = vmatprep.mubr.bf16.mxu0 %v1310
      %1688 = vmatmul.mubr.bf16.gmra.mrb[0].mxu0 %v1309
      %v1689 = vpop.f32.mrb[0].mxu0
      %v1690 = vadd.f32 0.0, %v1689
      %v1691 = vpop.f32.mrb[0].mxu0
      %v1692 = vpop.f32.mrb[0].mxu0
      %v1693 = vadd.f32 0.0, %v1692
      %v1694 = vpop.f32.mrb[0].mxu0
      %1695 = vdwg.mxu0
      %v1696 = vadd.f32 %v1487, %v1570
      %v1697 = vadd.f32 %v1488, %v1573
      %v1698 = vadd.f32 %v1489, %v1578
      %v1699 = vadd.f32 %v1490, %v1581
      %v1700 = vadd.f32 %v1491, %v1586
      %v1701 = vadd.f32 %v1492, %v1589
      %v1702 = vadd.f32 %v1493, %v1594
      %v1703 = vadd.f32 %v1494, %v1597
      %v1704 = vadd.f32 %v1495, %v1602
      %v1705 = vadd.f32 %v1496, %v1605
      %v1706 = vadd.f32 %v1497, %v1610
      %v1707 = vadd.f32 %v1498, %v1613
      %v1708 = vadd.f32 %v1499, %v1618
      %v1709 = vadd.f32 %v1500, %v1621
      %v1710 = vadd.f32 %v1501, %v1626
      %v1711 = vadd.f32 %v1502, %v1629
      %v1712 = vadd.f32 %v1503, %v1634
      %v1713 = vadd.f32 %v1504, %v1637
      %v1714 = vadd.f32 %v1505, %v1642
      %v1715 = vadd.f32 %v1506, %v1645
      %v1716 = vadd.f32 %v1507, %v1650
      %v1717 = vadd.f32 %v1508, %v1653
      %v1718 = vadd.f32 %v1509, %v1658
      %v1719 = vadd.f32 %v1510, %v1661
      %v1720 = vadd.f32 %v1511, %v1666
      %v1721 = vadd.f32 %v1512, %v1669
      %v1722 = vadd.f32 %v1513, %v1674
      %v1723 = vadd.f32 %v1514, %v1677
      %v1724 = vadd.f32 %v1515, %v1682
      %v1725 = vadd.f32 %v1516, %v1685
      %v1726 = vadd.f32 %v1517, %v1690
      %v1727 = vadd.f32 %v1518, %v1693
      %1728 = vst [vmem:[#allocation4] sm:$0xff] %v1696
      %1729 = vst [vmem:[#allocation4 + $0x8] sm:$0xff] %v1697
      %1730 = vst [vmem:[#allocation4 + $0x10] sm:$0xff] %v1698
      %1731 = vst [vmem:[#allocation4 + $0x18] sm:$0xff] %v1699
      %1732 = vst [vmem:[#allocation4 + $0x20] sm:$0xff] %v1700
      %1733 = vst [vmem:[#allocation4 + $0x28] sm:$0xff] %v1701
      %1734 = vst [vmem:[#allocation4 + $0x30] sm:$0xff] %v1702
      %1735 = vst [vmem:[#allocation4 + $0x38] sm:$0xff] %v1703
      %1736 = vst [vmem:[#allocation4 + $0x40] sm:$0xff] %v1704
      %1737 = vst [vmem:[#allocation4 + $0x48] sm:$0xff] %v1705
      %1738 = vst [vmem:[#allocation4 + $0x50] sm:$0xff] %v1706
      %1739 = vst [vmem:[#allocation4 + $0x58] sm:$0xff] %v1707
      %1740 = vst [vmem:[#allocation4 + $0x60] sm:$0xff] %v1708
      %1741 = vst [vmem:[#allocation4 + $0x68] sm:$0xff] %v1709
      %1742 = vst [vmem:[#allocation4 + $0x70] sm:$0xff] %v1710
      %1743 = vst [vmem:[#allocation4 + $0x78] sm:$0xff] %v1711
      %1744 = vst [vmem:[#allocation4 + $0x80] sm:$0xff] %v1712
      %1745 = vst [vmem:[#allocation4 + $0x88] sm:$0xff] %v1713
      %1746 = vst [vmem:[#allocation4 + $0x90] sm:$0xff] %v1714
      %1747 = vst [vmem:[#allocation4 + $0x98] sm:$0xff] %v1715
      %1748 = vst [vmem:[#allocation4 + $0xa0] sm:$0xff] %v1716
      %1749 = vst [vmem:[#allocation4 + $0xa8] sm:$0xff] %v1717
      %1750 = vst [vmem:[#allocation4 + $0xb0] sm:$0xff] %v1718
      %1751 = vst [vmem:[#allocation4 + $0xb8] sm:$0xff] %v1719
      %1752 = vst [vmem:[#allocation4 + $0xc0] sm:$0xff] %v1720
      %1753 = vst [vmem:[#allocation4 + $0xc8] sm:$0xff] %v1721
      %1754 = vst [vmem:[#allocation4 + $0xd0] sm:$0xff] %v1722
      %1755 = vst [vmem:[#allocation4 + $0xd8] sm:$0xff] %v1723
      %1756 = vst [vmem:[#allocation4 + $0xe0] sm:$0xff] %v1724
      %1757 = vst [vmem:[#allocation4 + $0xe8] sm:$0xff] %v1725
      %1758 = vst [vmem:[#allocation4 + $0xf0] sm:$0xff] %v1726
      %1759 = vst [vmem:[#allocation4 + $0xf8] sm:$0xff] %v1727
      // Predicated region
      $region37: #{tpu_custom_call.1} parent=31 // pred_check
        %p1760 = pneg %p290
      $region38: #{tpu_custom_call.1} parent=31 // pred_check_branch
        %1762 = sbr.rel (%p1760) target = $region40
      $region39: #{tpu_custom_call.1} parent=31 // pred_region
        %v1763 = vld [vmem:[#allocation4] sm:$0xff]
        %v1764 = vld [vmem:[#allocation4 + $0x8] sm:$0xff]
        %v1765 = vld [vmem:[#allocation4 + $0x10] sm:$0xff]
        %v1766 = vld [vmem:[#allocation4 + $0x18] sm:$0xff]
        %v1767 = vld [vmem:[#allocation4 + $0x20] sm:$0xff]
        %v1768 = vld [vmem:[#allocation4 + $0x28] sm:$0xff]
        %v1769 = vld [vmem:[#allocation4 + $0x30] sm:$0xff]
        %v1770 = vld [vmem:[#allocation4 + $0x38] sm:$0xff]
        %v1771 = vld [vmem:[#allocation4 + $0x40] sm:$0xff]
        %v1772 = vld [vmem:[#allocation4 + $0x48] sm:$0xff]
        %v1773 = vld [vmem:[#allocation4 + $0x50] sm:$0xff]
        %v1774 = vld [vmem:[#allocation4 + $0x58] sm:$0xff]
        %v1775 = vld [vmem:[#allocation4 + $0x60] sm:$0xff]
        %v1776 = vld [vmem:[#allocation4 + $0x68] sm:$0xff]
        %v1777 = vld [vmem:[#allocation4 + $0x70] sm:$0xff]
        %v1778 = vld [vmem:[#allocation4 + $0x78] sm:$0xff]
        %v1779 = vld [vmem:[#allocation4 + $0x80] sm:$0xff]
        %v1780 = vld [vmem:[#allocation4 + $0x88] sm:$0xff]
        %v1781 = vld [vmem:[#allocation4 + $0x90] sm:$0xff]
        %v1782 = vld [vmem:[#allocation4 + $0x98] sm:$0xff]
        %v1783 = vld [vmem:[#allocation4 + $0xa0] sm:$0xff]
        %v1784 = vld [vmem:[#allocation4 + $0xa8] sm:$0xff]
        %v1785 = vld [vmem:[#allocation4 + $0xb0] sm:$0xff]
        %v1786 = vld [vmem:[#allocation4 + $0xb8] sm:$0xff]
        %v1787 = vld [vmem:[#allocation4 + $0xc0] sm:$0xff]
        %v1788 = vld [vmem:[#allocation4 + $0xc8] sm:$0xff]
        %v1789 = vld [vmem:[#allocation4 + $0xd0] sm:$0xff]
        %v1790 = vld [vmem:[#allocation4 + $0xd8] sm:$0xff]
        %v1791 = vld [vmem:[#allocation4 + $0xe0] sm:$0xff]
        %v1792 = vld [vmem:[#allocation4 + $0xe8] sm:$0xff]
        %v1793 = vld [vmem:[#allocation4 + $0xf0] sm:$0xff]
        %v1794 = vld [vmem:[#allocation4 + $0xf8] sm:$0xff]
        %v1795 = vrcp.pop %v1763
        %v1796 = vrcp.pop %v1764
        %v1797 = vrcp.pop %v1765
        %v1798 = vrcp.pop %v1766
        %v1799 = vrcp.pop %v1767
        %v1800 = vrcp.pop %v1768
        %v1801 = vrcp.pop %v1769
        %v1802 = vrcp.pop %v1770
        %v1803 = vrcp.pop %v1771
        %v1804 = vrcp.pop %v1772
        %v1805 = vrcp.pop %v1773
        %v1806 = vrcp.pop %v1774
        %v1807 = vrcp.pop %v1775
        %v1808 = vrcp.pop %v1776
        %v1809 = vrcp.pop %v1777
        %v1810 = vrcp.pop %v1778
        %v1811 = vrcp.pop %v1779
        %v1812 = vrcp.pop %v1780
        %v1813 = vrcp.pop %v1781
        %v1814 = vrcp.pop %v1782
        %v1815 = vrcp.pop %v1783
        %v1816 = vrcp.pop %v1784
        %v1817 = vrcp.pop %v1785
        %v1818 = vrcp.pop %v1786
        %v1819 = vrcp.pop %v1787
        %v1820 = vrcp.pop %v1788
        %v1821 = vrcp.pop %v1789
        %v1822 = vrcp.pop %v1790
        %v1823 = vrcp.pop %v1791
        %v1824 = vrcp.pop %v1792
        %v1825 = vrcp.pop %v1793
        %v1826 = vrcp.pop %v1794
        %1828 = vset.pattern.permute.xlu0 64
        %1829 = vperm.xlu0 %1828, %v1795
        %v1830 = vpop.permute.xlu0 %1829
        %1833 = vset.pattern.permute.xlu0 64
        %1834 = vperm.xlu0 %1833, %v1796
        %v1835 = vpop.permute.xlu0 %1834
        %1838 = vset.pattern.permute.xlu0 64
        %1839 = vperm.xlu0 %1838, %v1797
        %v1840 = vpop.permute.xlu0 %1839
        %1843 = vset.pattern.permute.xlu0 64
        %1844 = vperm.xlu0 %1843, %v1798
        %v1845 = vpop.permute.xlu0 %1844
        %1848 = vset.pattern.permute.xlu0 64
        %1849 = vperm.xlu0 %1848, %v1799
        %v1850 = vpop.permute.xlu0 %1849
        %1853 = vset.pattern.permute.xlu0 64
        %1854 = vperm.xlu0 %1853, %v1800
        %v1855 = vpop.permute.xlu0 %1854
        %1858 = vset.pattern.permute.xlu0 64
        %1859 = vperm.xlu0 %1858, %v1801
        %v1860 = vpop.permute.xlu0 %1859
        %1863 = vset.pattern.permute.xlu0 64
        %1864 = vperm.xlu0 %1863, %v1802
        %v1865 = vpop.permute.xlu0 %1864
        %1868 = vset.pattern.permute.xlu0 64
        %1869 = vperm.xlu0 %1868, %v1803
        %v1870 = vpop.permute.xlu0 %1869
        %1873 = vset.pattern.permute.xlu0 64
        %1874 = vperm.xlu0 %1873, %v1804
        %v1875 = vpop.permute.xlu0 %1874
        %1878 = vset.pattern.permute.xlu0 64
        %1879 = vperm.xlu0 %1878, %v1805
        %v1880 = vpop.permute.xlu0 %1879
        %1883 = vset.pattern.permute.xlu0 64
        %1884 = vperm.xlu0 %1883, %v1806
        %v1885 = vpop.permute.xlu0 %1884
        %1888 = vset.pattern.permute.xlu0 64
        %1889 = vperm.xlu0 %1888, %v1807
        %v1890 = vpop.permute.xlu0 %1889
        %1893 = vset.pattern.permute.xlu0 64
        %1894 = vperm.xlu0 %1893, %v1808
        %v1895 = vpop.permute.xlu0 %1894
        %1898 = vset.pattern.permute.xlu0 64
        %1899 = vperm.xlu0 %1898, %v1809
        %v1900 = vpop.permute.xlu0 %1899
        %1903 = vset.pattern.permute.xlu0 64
        %1904 = vperm.xlu0 %1903, %v1810
        %v1905 = vpop.permute.xlu0 %1904
        %1908 = vset.pattern.permute.xlu0 64
        %1909 = vperm.xlu0 %1908, %v1811
        %v1910 = vpop.permute.xlu0 %1909
        %1913 = vset.pattern.permute.xlu0 64
        %1914 = vperm.xlu0 %1913, %v1812
        %v1915 = vpop.permute.xlu0 %1914
        %1918 = vset.pattern.permute.xlu0 64
        %1919 = vperm.xlu0 %1918, %v1813
        %v1920 = vpop.permute.xlu0 %1919
        %1923 = vset.pattern.permute.xlu0 64
        %1924 = vperm.xlu0 %1923, %v1814
        %v1925 = vpop.permute.xlu0 %1924
        %1928 = vset.pattern.permute.xlu0 64
        %1929 = vperm.xlu0 %1928, %v1815
        %v1930 = vpop.permute.xlu0 %1929
        %1933 = vset.pattern.permute.xlu0 64
        %1934 = vperm.xlu0 %1933, %v1816
        %v1935 = vpop.permute.xlu0 %1934
        %1938 = vset.pattern.permute.xlu0 64
        %1939 = vperm.xlu0 %1938, %v1817
        %v1940 = vpop.permute.xlu0 %1939
        %1943 = vset.pattern.permute.xlu0 64
        %1944 = vperm.xlu0 %1943, %v1818
        %v1945 = vpop.permute.xlu0 %1944
        %1948 = vset.pattern.permute.xlu0 64
        %1949 = vperm.xlu0 %1948, %v1819
        %v1950 = vpop.permute.xlu0 %1949
        %1953 = vset.pattern.permute.xlu0 64
        %1954 = vperm.xlu0 %1953, %v1820
        %v1955 = vpop.permute.xlu0 %1954
        %1958 = vset.pattern.permute.xlu0 64
        %1959 = vperm.xlu0 %1958, %v1821
        %v1960 = vpop.permute.xlu0 %1959
        %1963 = vset.pattern.permute.xlu0 64
        %1964 = vperm.xlu0 %1963, %v1822
        %v1965 = vpop.permute.xlu0 %1964
        %1968 = vset.pattern.permute.xlu0 64
        %1969 = vperm.xlu0 %1968, %v1823
        %v1970 = vpop.permute.xlu0 %1969
        %1973 = vset.pattern.permute.xlu0 64
        %1974 = vperm.xlu0 %1973, %v1824
        %v1975 = vpop.permute.xlu0 %1974
        %1978 = vset.pattern.permute.xlu0 64
        %1979 = vperm.xlu0 %1978, %v1825
        %v1980 = vpop.permute.xlu0 %1979
        %1983 = vset.pattern.permute.xlu0 64
        %1984 = vperm.xlu0 %1983, %v1826
        %v1985 = vpop.permute.xlu0 %1984
        %v1987 = vmul.f32 %v1763, %v1830
        %v1988 = vmul.f32 %v1764, %v1835
        %v1989 = vmul.f32 %v1765, %v1840
        %v1990 = vmul.f32 %v1766, %v1845
        %v1991 = vmul.f32 %v1767, %v1850
        %v1992 = vmul.f32 %v1768, %v1855
        %v1993 = vmul.f32 %v1769, %v1860
        %v1994 = vmul.f32 %v1770, %v1865
        %v1995 = vmul.f32 %v1771, %v1870
        %v1996 = vmul.f32 %v1772, %v1875
        %v1997 = vmul.f32 %v1773, %v1880
        %v1998 = vmul.f32 %v1774, %v1885
        %v1999 = vmul.f32 %v1775, %v1890
        %v2000 = vmul.f32 %v1776, %v1895
        %v2001 = vmul.f32 %v1777, %v1900
        %v2002 = vmul.f32 %v1778, %v1905
        %v2003 = vmul.f32 %v1779, %v1910
        %v2004 = vmul.f32 %v1780, %v1915
        %v2005 = vmul.f32 %v1781, %v1920
        %v2006 = vmul.f32 %v1782, %v1925
        %v2007 = vmul.f32 %v1783, %v1930
        %v2008 = vmul.f32 %v1784, %v1935
        %v2009 = vmul.f32 %v1785, %v1940
        %v2010 = vmul.f32 %v1786, %v1945
        %v2011 = vmul.f32 %v1787, %v1950
        %v2012 = vmul.f32 %v1788, %v1955
        %v2013 = vmul.f32 %v1789, %v1960
        %v2014 = vmul.f32 %v1790, %v1965
        %v2015 = vmul.f32 %v1791, %v1970
        %v2016 = vmul.f32 %v1792, %v1975
        %v2017 = vmul.f32 %v1793, %v1980
        %v2018 = vmul.f32 %v1794, %v1985
        %v2019 = vpack.c.bf16 %v1988, %v1987
        %v2020 = vpack.c.bf16 %v1990, %v1989
        %v2021 = vpack.c.bf16 %v1992, %v1991
        %v2022 = vpack.c.bf16 %v1994, %v1993
        %v2023 = vpack.c.bf16 %v1996, %v1995
        %v2024 = vpack.c.bf16 %v1998, %v1997
        %v2025 = vpack.c.bf16 %v2000, %v1999
        %v2026 = vpack.c.bf16 %v2002, %v2001
        %v2027 = vpack.c.bf16 %v2004, %v2003
        %v2028 = vpack.c.bf16 %v2006, %v2005
        %v2029 = vpack.c.bf16 %v2008, %v2007
        %v2030 = vpack.c.bf16 %v2010, %v2009
        %v2031 = vpack.c.bf16 %v2012, %v2011
        %v2032 = vpack.c.bf16 %v2014, %v2013
        %v2033 = vpack.c.bf16 %v2016, %v2015
        %v2034 = vpack.c.bf16 %v2018, %v2017
        %v2051 = vunpack.c.l.b16 %v2019
        %v2052 = vunpack.c.h.b16 %v2019
        %v2053 = vunpack.c.l.b16 %v2020
        %v2054 = vunpack.c.h.b16 %v2020
        %v2055 = vunpack.c.l.b16 %v2021
        %v2056 = vunpack.c.h.b16 %v2021
        %v2057 = vunpack.c.l.b16 %v2022
        %v2058 = vunpack.c.h.b16 %v2022
        %v2059 = vunpack.c.l.b16 %v2023
        %v2060 = vunpack.c.h.b16 %v2023
        %v2061 = vunpack.c.l.b16 %v2024
        %v2062 = vunpack.c.h.b16 %v2024
        %v2063 = vunpack.c.l.b16 %v2025
        %v2064 = vunpack.c.h.b16 %v2025
        %v2065 = vunpack.c.l.b16 %v2026
        %v2066 = vunpack.c.h.b16 %v2026
        %v2067 = vunpack.c.l.b16 %v2027
        %v2068 = vunpack.c.h.b16 %v2027
        %v2069 = vunpack.c.l.b16 %v2028
        %v2070 = vunpack.c.h.b16 %v2028
        %v2071 = vunpack.c.l.b16 %v2029
        %v2072 = vunpack.c.h.b16 %v2029
        %v2073 = vunpack.c.l.b16 %v2030
        %v2074 = vunpack.c.h.b16 %v2030
        %v2075 = vunpack.c.l.b16 %v2031
        %v2076 = vunpack.c.h.b16 %v2031
        %v2077 = vunpack.c.l.b16 %v2032
        %v2078 = vunpack.c.h.b16 %v2032
        %v2079 = vunpack.c.l.b16 %v2033
        %v2080 = vunpack.c.h.b16 %v2033
        %v2081 = vunpack.c.l.b16 %v2034
        %v2082 = vunpack.c.h.b16 %v2034
        %v2083 = vpack.c.b16 %v2051, %v2051
        %v2084 = vpack.c.b16 %v2052, %v2052
        %v2085 = vpack.c.b16 %v2053, %v2053
        %v2086 = vpack.c.b16 %v2054, %v2054
        %v2087 = vpack.c.b16 %v2055, %v2055
        %v2088 = vpack.c.b16 %v2056, %v2056
        %v2089 = vpack.c.b16 %v2057, %v2057
        %v2090 = vpack.c.b16 %v2058, %v2058
        %v2091 = vpack.c.b16 %v2059, %v2059
        %v2092 = vpack.c.b16 %v2060, %v2060
        %v2093 = vpack.c.b16 %v2061, %v2061
        %v2094 = vpack.c.b16 %v2062, %v2062
        %v2095 = vpack.c.b16 %v2063, %v2063
        %v2096 = vpack.c.b16 %v2064, %v2064
        %v2097 = vpack.c.b16 %v2065, %v2065
        %v2098 = vpack.c.b16 %v2066, %v2066
        %v2099 = vpack.c.b16 %v2067, %v2067
        %v2100 = vpack.c.b16 %v2068, %v2068
        %v2101 = vpack.c.b16 %v2069, %v2069
        %v2102 = vpack.c.b16 %v2070, %v2070
        %v2103 = vpack.c.b16 %v2071, %v2071
        %v2104 = vpack.c.b16 %v2072, %v2072
        %v2105 = vpack.c.b16 %v2073, %v2073
        %v2106 = vpack.c.b16 %v2074, %v2074
        %v2107 = vpack.c.b16 %v2075, %v2075
        %v2108 = vpack.c.b16 %v2076, %v2076
        %v2109 = vpack.c.b16 %v2077, %v2077
        %v2110 = vpack.c.b16 %v2078, %v2078
        %v2111 = vpack.c.b16 %v2079, %v2079
        %v2112 = vpack.c.b16 %v2080, %v2080
        %v2113 = vpack.c.b16 %v2081, %v2081
        %v2114 = vpack.c.b16 %v2082, %v2082
        %vm2147 = vcmask 519168
        %2148 = vst.msk [vmem:[%s287] sm:$0xf] %vm2147, %v2083
        %2149 = vst.msk [vmem:[%s287 + $0x4] sm:$0xf] %vm2147, %v2084
        %2150 = vst.msk [vmem:[%s287 + $0x8] sm:$0xf] %vm2147, %v2085
        %2151 = vst.msk [vmem:[%s287 + $0xc] sm:$0xf] %vm2147, %v2086
        %2152 = vst.msk [vmem:[%s287 + $0x10] sm:$0xf] %vm2147, %v2087
        %2153 = vst.msk [vmem:[%s287 + $0x14] sm:$0xf] %vm2147, %v2088
        %2154 = vst.msk [vmem:[%s287 + $0x18] sm:$0xf] %vm2147, %v2089
        %2155 = vst.msk [vmem:[%s287 + $0x1c] sm:$0xf] %vm2147, %v2090
        %2156 = vst.msk [vmem:[%s287 + $0x20] sm:$0xf] %vm2147, %v2091
        %2157 = vst.msk [vmem:[%s287 + $0x24] sm:$0xf] %vm2147, %v2092
        %2158 = vst.msk [vmem:[%s287 + $0x28] sm:$0xf] %vm2147, %v2093
        %2159 = vst.msk [vmem:[%s287 + $0x2c] sm:$0xf] %vm2147, %v2094
        %2160 = vst.msk [vmem:[%s287 + $0x30] sm:$0xf] %vm2147, %v2095
        %2161 = vst.msk [vmem:[%s287 + $0x34] sm:$0xf] %vm2147, %v2096
        %2162 = vst.msk [vmem:[%s287 + $0x38] sm:$0xf] %vm2147, %v2097
        %2163 = vst.msk [vmem:[%s287 + $0x3c] sm:$0xf] %vm2147, %v2098
        %2164 = vst.msk [vmem:[%s287 + $0x40] sm:$0xf] %vm2147, %v2099
        %2165 = vst.msk [vmem:[%s287 + $0x44] sm:$0xf] %vm2147, %v2100
        %2166 = vst.msk [vmem:[%s287 + $0x48] sm:$0xf] %vm2147, %v2101
        %2167 = vst.msk [vmem:[%s287 + $0x4c] sm:$0xf] %vm2147, %v2102
        %2168 = vst.msk [vmem:[%s287 + $0x50] sm:$0xf] %vm2147, %v2103
        %2169 = vst.msk [vmem:[%s287 + $0x54] sm:$0xf] %vm2147, %v2104
        %2170 = vst.msk [vmem:[%s287 + $0x58] sm:$0xf] %vm2147, %v2105
        %2171 = vst.msk [vmem:[%s287 + $0x5c] sm:$0xf] %vm2147, %v2106
        %2172 = vst.msk [vmem:[%s287 + $0x60] sm:$0xf] %vm2147, %v2107
        %2173 = vst.msk [vmem:[%s287 + $0x64] sm:$0xf] %vm2147, %v2108
        %2174 = vst.msk [vmem:[%s287 + $0x68] sm:$0xf] %vm2147, %v2109
        %2175 = vst.msk [vmem:[%s287 + $0x6c] sm:$0xf] %vm2147, %v2110
        %2176 = vst.msk [vmem:[%s287 + $0x70] sm:$0xf] %vm2147, %v2111
        %2177 = vst.msk [vmem:[%s287 + $0x74] sm:$0xf] %vm2147, %v2112
        %2178 = vst.msk [vmem:[%s287 + $0x78] sm:$0xf] %vm2147, %v2113
        %2179 = vst.msk [vmem:[%s287 + $0x7c] sm:$0xf] %vm2147, %v2114
      $region40: #{tpu_custom_call.1} parent=31 // pred_fallthru
        _
      %s2180 = smul.u32 32, %s20
      %p2181 = scmp.lt.s32.totalorder %s19, 3
      %s2182 = scalar_select %p2181, %s19, 3
      %p2183 = scmp.lt.s32.totalorder %s2180, 31
      %s2184 = scalar_select %p2183, %s2180, 31
      %s2185 = smul.addr %s2182, 32
      %s2186 = sadd.s32 %s2184, %s2185
      %s2187 = smul.addr %s2186, 4
      %s2188 = scalar_lea.vmem %s3, %s2187
      // Predicated region
      $region41: #{tpu_custom_call.1} parent=31 // pred_check
        %p2189 = pneg %p137
      $region42: #{tpu_custom_call.1} parent=31 // pred_check_branch
        %2191 = sbr.rel (%p2189) target = $region44
      $region43: #{tpu_custom_call.1} parent=31 // pred_region
        %s2192 = smul.u32 32, %s20
      $region44: #{tpu_custom_call.1} parent=31 // pred_fallthru
        _
    $region32: #{tpu_custom_call.1} parent=5 // pred_fallthru
      _
    %p2193 = scmp.le.s32.totalorder 2, %s9
    // Predicated region
    $region45: #{tpu_custom_call.1} parent=5 // pred_check
      %p2194 = pneg %p2193
    $region46: #{tpu_custom_call.1} parent=5 // pred_check_branch
      %2196 = sbr.rel (%p2194) target = $region48
    $region47: #{tpu_custom_call.1} parent=5 // pred_region
      %s2197 = ssub.s32 %s9, 2
      // Predicated region
      $region49: #{tpu_custom_call.1} parent=47 // pred_check
        %p2198 = pneg %p143
      $region50: #{tpu_custom_call.1} parent=47 // pred_check_branch
        %2200 = sbr.rel (%p2198) target = $region52
      $region51: #{tpu_custom_call.1} parent=47 // pred_region
        %s2201 = smul.u32 32, %s23
        %p2202 = scmp.lt.s32.totalorder %s22, 3
        %s2203 = scalar_select %p2202, %s22, 3
        %p2204 = scmp.lt.s32.totalorder %s2201, 31
        %s2205 = scalar_select %p2204, %s2201, 31
        %s2206 = smul.addr %s2203, 32
        %s2207 = sadd.s32 %s2205, %s2206
        %s2208 = smul.addr %s2207, 4
        %s2209 = scalar_lea.vmem %s3, %s2208
      $region52: #{tpu_custom_call.1} parent=47 // pred_fallthru
        _
    $region48: #{tpu_custom_call.1} parent=5 // pred_fallthru
      _
  $region6: #{tpu_custom_call.1} parent=0 // loop_footer
    %s13 = sadd.s32 1, %s9
  $region7: #{tpu_custom_call.1} parent=0 // loop_footer_branch
    %8 = sbr.rel target = $region3
  $region8: #{tpu_custom_call.1} parent=0 // loop_exit
    _

</llo_original>
